<compile_context>
chip_gen: v5e
topology: v5e:2x2
jax: 0.10.0
libtpu: 0.0.40
codegen_flags: <defaults>
</compile_context>

<pallas_src>
import functools
import math

import jax
import jax.numpy as jnp
from jax.experimental import pallas as pl
from jax.experimental.pallas import tpu as pltpu

_INV_SQRT2 = 1.0 / math.sqrt(2.0)


def _gelu_exact(x):
    # Exact (erf-based) GELU, matching torch.nn.GELU default.
    return 0.5 * x * (1.0 + jax.lax.erf(x * _INV_SQRT2))


def _round_up(n, m):
    return ((n + m - 1) // m) * m


def _pad_to(a, shape):
    return jnp.pad(a, [(0, s - d) for d, s in zip(a.shape, shape)])


def _pick_block_b(B, H, W, Cp, Hdp, *, vmem_budget=24 << 20, max_bt=8):
    """Images per grid step.

    Pick the biggest block that (a) keeps the big in-kernel f32 intermediates
    comfortably inside scoped VMEM and (b) leaves >= 2 grid steps when B > 1
    (v7x has 2 TensorCores sharing the "parallel" axis).
    """
    HW = H * W
    per_img = HW * Hdp * 4 * 3          # h / shortcut / acc, f32
    per_img += HW * Cp * (2 + 4)        # bf16 token tile + f32 conv3 output
    bt = max(1, min(max_bt, vmem_budget // max(per_img, 1)))
    bt = min(bt, B)
    if B > 1:
        bt = min(bt, pl.cdiv(B, 2))
    return max(1, bt)


def _daff_kernel(cls_ref, tok_ref, w1_ref, b1_ref, dw_ref, b2_ref,
                 w3_ref, b3_ref, wc_ref, bc_ref, we_ref, be_ref,
                 ocls_ref, otok_ref, *, approx_gelu):
    Bt, H, W, Cp = tok_ref.shape
    Hdp = w1_ref.shape[1]
    HW = H * W
    M = Bt * HW

    if approx_gelu:
        act = lambda v: jax.nn.gelu(v, approximate=True)   # tanh -> EUP
    else:
        act = _gelu_exact                                   # matches torch default

    # ---- conv1 (1x1, C -> Hd) + folded bn1 + GELU  (bf16 MXU, f32 accumulate)
    x = tok_ref[...].reshape(M, Cp)                          # bf16
    h = jnp.dot(x, w1_ref[...], preferred_element_type=jnp.float32) + b1_ref[...]
    h = act(h)                                               # (M, Hdp) f32
    shortcut = h

    # ---- depthwise 3x3 conv + folded bn2 + GELU, all in registers.
    # Zero-padded stencil: H taps via slice/concat on a non-minor axis,
    # W taps via in-register sublane shifts (no VMEM scratch round trip).
    h4 = h.reshape(Bt, H, W, Hdp)
    dw = dw_ref[...].astype(jnp.float32)                     # (9, Hdp)
    zrow = jnp.zeros((Bt, 1, W, Hdp), jnp.float32)
    zcol = jnp.zeros((Bt, H, 1, Hdp), jnp.float32)

    def shift_h(t, dy):      # result[:, y] = t[:, y+dy], zeros out of range
        if dy < 0:
            return jnp.concatenate([zrow, t[:, :H - 1]], axis=1)
        if dy > 0:
            return jnp.concatenate([t[:, 1:], zrow], axis=1)
        return t

    def shift_w(t, dx):      # result[..., w, :] = t[..., w+dx, :], zeros OOB
        if dx < 0:
            return jnp.concatenate([zcol, t[:, :, :W - 1]], axis=2)
        if dx > 0:
            return jnp.concatenate([t[:, :, 1:], zcol], axis=2)
        return t

    acc = jnp.zeros((Bt, H, W, Hdp), jnp.float32)
    for ky in range(3):
        band = shift_h(h4, ky - 1)
        for kx in range(3):
            tap = shift_w(band, kx - 1)
            acc = acc + tap * dw[ky * 3 + kx][None, None, None, :]
    h2 = shortcut + act(acc.reshape(M, Hdp) + b2_ref[...])   # residual, (M, Hdp)

    # ---- conv3 (1x1, Hd -> C) + folded bn3
    y = jnp.dot(h2.astype(jnp.bfloat16), w3_ref[...],
                preferred_element_type=jnp.float32) + b3_ref[...]    # (M, Cp)

    # ---- squeeze (global avg pool) + excite MLP, batched over the Bt images
    pooled = jnp.mean(y.reshape(Bt, HW, Cp), axis=1)                 # (Bt, Cp)
    z = act(jnp.dot(pooled.astype(jnp.bfloat16), wc_ref[...],
                    preferred_element_type=jnp.float32) + bc_ref[...])
    wgt = jnp.dot(z.astype(jnp.bfloat16), we_ref[...],
                  preferred_element_type=jnp.float32) + be_ref[...]  # (Bt, Cp)

    ocls_ref[...] = (cls_ref[...].astype(jnp.float32)
                     * wgt.reshape(Bt, 1, Cp)).astype(ocls_ref.dtype)
    otok_ref[...] = y.reshape(Bt, HW, Cp).astype(otok_ref.dtype)


def daff_pallas(x, p, *, block_b=None, approx_gelu=False):
    B, N, C = x.shape
    HW = N - 1
    H = int(math.isqrt(HW))
    assert H * H == HW, "token count must be a perfect square + 1"
    W = H
    Hd = p["w1"].shape[1]
    Cr = p["wc"].shape[1]

    # Lane-dense channel padding (no-op when C/Hd/Cr are already multiples of 128).
    Cp = _round_up(C, 128)
    Hdp = _round_up(Hd, 128)
    Crp = _round_up(Cr, 128)

    bt = block_b or _pick_block_b(B, H, W, Cp, Hdp)
    Bp = _round_up(B, bt)
    grid = (Bp // bt,)

    cls = x[:, :1, :]                                       # (B, 1, C)
    tok = x[:, 1:, :].reshape(B, H, W, C)                   # (B, H, W, C)
    if Bp != B:
        cls = jnp.pad(cls, ((0, Bp - B), (0, 0), (0, 0)))
        tok = jnp.pad(tok, ((0, Bp - B), (0, 0), (0, 0), (0, 0)))
    if Cp != C:
        cls = jnp.pad(cls, ((0, 0), (0, 0), (0, Cp - C)))
        tok = jnp.pad(tok, ((0, 0), (0, 0), (0, 0), (0, Cp - C)))
    cls = cls.astype(jnp.bfloat16)
    tok = tok.astype(jnp.bfloat16)

    # Params: weights in bf16 (MXU operands), biases in f32.
    w1 = _pad_to(p["w1"], (Cp, Hdp)).astype(jnp.bfloat16)
    dw = _pad_to(p["dw"], (9, Hdp)).astype(jnp.bfloat16)
    w3 = _pad_to(p["w3"], (Hdp, Cp)).astype(jnp.bfloat16)
    wc = _pad_to(p["wc"], (Cp, Crp)).astype(jnp.bfloat16)
    we = _pad_to(p["we"], (Crp, Cp)).astype(jnp.bfloat16)
    b1 = _pad_to(p["b1"].reshape(1, -1), (1, Hdp)).astype(jnp.float32)
    b2 = _pad_to(p["b2"].reshape(1, -1), (1, Hdp)).astype(jnp.float32)
    b3 = _pad_to(p["b3"].reshape(1, -1), (1, Cp)).astype(jnp.float32)
    bc = _pad_to(p["bc"].reshape(1, -1), (1, Crp)).astype(jnp.float32)
    be = _pad_to(p["be"].reshape(1, -1), (1, Cp)).astype(jnp.float32)

    def wspec(a):
        nd = a.ndim
        return pl.BlockSpec(a.shape, lambda b, _nd=nd: (0,) * _nd)

    grid_spec = pltpu.PrefetchScalarGridSpec(
        num_scalar_prefetch=0,
        grid=grid,
        in_specs=[
            pl.BlockSpec((bt, 1, Cp), lambda b: (b, 0, 0)),
            pl.BlockSpec((bt, H, W, Cp), lambda b: (b, 0, 0, 0)),
            wspec(w1), wspec(b1), wspec(dw), wspec(b2),
            wspec(w3), wspec(b3), wspec(wc), wspec(bc), wspec(we), wspec(be),
        ],
        out_specs=[
            pl.BlockSpec((bt, 1, Cp), lambda b: (b, 0, 0)),
            pl.BlockSpec((bt, HW, Cp), lambda b: (b, 0, 0)),
        ],
    )

    ocls, otok = pl.pallas_call(
        functools.partial(_daff_kernel, approx_gelu=approx_gelu),
        out_shape=(jax.ShapeDtypeStruct((Bp, 1, Cp), x.dtype),
                   jax.ShapeDtypeStruct((Bp, HW, Cp), x.dtype)),
        grid_spec=grid_spec,
        compiler_params=pltpu.CompilerParams(
            dimension_semantics=("parallel",),
            # headroom for larger block_b; still fits v7x's 64 MiB VMEM
            vmem_limit_bytes=48 * 1024 * 1024,
        ),
    )(cls, tok, w1, b1, dw, b2, w3, b3, wc, bc, we, be)

    return jnp.concatenate([ocls[:B, :, :C], otok[:B, :, :C]], axis=1)


def make_params(key, C, Hd, Cr, eps=1e-5):
    """Deterministic torch-shaped params, with eval-mode BN folded into convs."""
    ks = jax.random.split(key, 13)

    def rnd(k, shape, scale=0.05):
        return scale * jax.random.normal(k, shape, jnp.float32)

    conv1_w = rnd(ks[0], (Hd, C))        # conv1.weight (Hd, C, 1, 1)
    conv1_b = rnd(ks[1], (Hd,))
    conv2_w = rnd(ks[2], (Hd, 3, 3))     # conv2.weight (Hd, 1, 3, 3) depthwise
    conv2_b = rnd(ks[3], (Hd,))
    conv3_w = rnd(ks[4], (C, Hd))        # conv3.weight (C, Hd, 1, 1)
    conv3_b = rnd(ks[5], (C,))
    comp_w = rnd(ks[6], (Cr, C))         # compress.weight
    comp_b = rnd(ks[7], (Cr,))
    exc_w = rnd(ks[8], (C, Cr))          # excitation.weight
    exc_b = rnd(ks[9], (C,))

    def bn(k, n):
        k1, k2, k3, k4 = jax.random.split(k, 4)
        gamma = 1.0 + 0.1 * jax.random.normal(k1, (n,), jnp.float32)
        beta = 0.1 * jax.random.normal(k2, (n,), jnp.float32)
        mean = 0.1 * jax.random.normal(k3, (n,), jnp.float32)
        var = 1.0 + 0.1 * jax.random.uniform(k4, (n,), jnp.float32)
        return gamma, beta, mean, var

    g1, be1, m1, v1 = bn(ks[10], Hd)
    g2, be2, m2, v2 = bn(ks[11], Hd)
    g3, be3, m3, v3 = bn(ks[12], C)

    def fold(w_out_last, b, g, bt, m, v):
        s = g / jnp.sqrt(v + eps)
        return w_out_last * s, (b - m) * s + bt

    w1, b1 = fold(conv1_w.T, conv1_b, g1, be1, m1, v1)            # (C, Hd), (Hd,)
    dw_flat = conv2_w.reshape(Hd, 9).T                            # (9, Hd), k = ky*3+kx
    dw, b2 = fold(dw_flat, conv2_b, g2, be2, m2, v2)
    w3, b3 = fold(conv3_w.T, conv3_b, g3, be3, m3, v3)            # (Hd, C), (C,)

    return dict(w1=w1, b1=b1, dw=dw, b2=b2, w3=w3, b3=b3,
                wc=comp_w.T, bc=comp_b, we=exc_w.T, be=exc_b)


def daff_ref(x, p):
    """Pure-JAX f32 reference of the same (BN-folded) forward, for validation."""
    B, N, C = x.shape
    HW = N - 1
    H = int(math.isqrt(HW))
    cls = x[:, :1, :]
    tok = x[:, 1:, :]
    h = _gelu_exact(tok @ p["w1"] + p["b1"])            # (B, HW, Hd)
    shortcut = h
    Hd = h.shape[-1]
    hw = h.reshape(B, H, H, Hd)
    hp = jnp.pad(hw, ((0, 0), (1, 1), (1, 1), (0, 0)))
    acc = jnp.zeros_like(hw)
    for ky in range(3):
        for kx in range(3):
            acc = acc + hp[:, ky:ky + H, kx:kx + H, :] * p["dw"][ky * 3 + kx]
    h2 = _gelu_exact(acc.reshape(B, HW, Hd) + p["b2"]) + shortcut
    y = h2 @ p["w3"] + p["b3"]                          # (B, HW, C)
    pooled = jnp.mean(y, axis=1, keepdims=True)         # (B, 1, C)
    wgt = _gelu_exact(pooled @ p["wc"] + p["bc"]) @ p["we"] + p["be"]
    return jnp.concatenate([cls * wgt, y], axis=1)


if __name__ == "__main__":
    B = 2
    H = 8                      # 8x8 spatial tokens
    C = 32                     # in_features == out_features
    Hd = 64                    # hidden_features
    Cr = C // 4
    N = H * H + 1              # +1 cls token

    key = jax.random.PRNGKey(0)
    k_x, k_p = jax.random.split(key)
    x = jax.random.normal(k_x, (B, N, C), jnp.float32)
    params = make_params(k_p, C, Hd, Cr)

    out = jax.block_until_ready(daff_pallas(x, params))

    ref = daff_ref(x, params)
    assert out.shape == (B, N, C)
    max_err = float(jnp.max(jnp.abs(out - ref)))
    # bf16 MXU operands (f32 accumulate) vs. an f32 reference.
    if max_err > 3e-2:
        raise AssertionError(f"Pallas kernel mismatch vs reference: max abs err {max_err}")
    print("KERNEL_OK")
</pallas_src>

<mosaic_0001>
module attributes {stable_mosaic.version = 11 : i64} {
  func.func @_daff_kernel(%arg0: i32, %arg1: memref<1x1x128xbf16, #tpu.memory_space<vmem>>, %arg2: memref<1x8x8x128xbf16, #tpu.memory_space<vmem>>, %arg3: memref<128x128xbf16, #tpu.memory_space<vmem>>, %arg4: memref<1x128xf32, #tpu.memory_space<vmem>>, %arg5: memref<9x128xbf16, #tpu.memory_space<vmem>>, %arg6: memref<1x128xf32, #tpu.memory_space<vmem>>, %arg7: memref<128x128xbf16, #tpu.memory_space<vmem>>, %arg8: memref<1x128xf32, #tpu.memory_space<vmem>>, %arg9: memref<128x128xbf16, #tpu.memory_space<vmem>>, %arg10: memref<1x128xf32, #tpu.memory_space<vmem>>, %arg11: memref<128x128xbf16, #tpu.memory_space<vmem>>, %arg12: memref<1x128xf32, #tpu.memory_space<vmem>>, %arg13: memref<1x1x128xf32, #tpu.memory_space<vmem>>, %arg14: memref<1x64x128xf32, #tpu.memory_space<vmem>>) attributes {dimension_semantics = [#tpu.dimension_semantics<parallel>], iteration_bounds = array<i64: 2>, scalar_prefetch = 0 : i64, scratch_operands = 0 : i64, tpu.core_type = #tpu.core_type<tc>, window_params = [{transform_indices = @transform_0, window_bounds = array<i64: 1, 1, 128>}, {transform_indices = @transform_1, window_bounds = array<i64: 1, 8, 8, 128>}, {pipeline_mode = #tpu.pipeline_mode<synchronous>, transform_indices = @transform_2, window_bounds = array<i64: 128, 128>}, {pipeline_mode = #tpu.pipeline_mode<synchronous>, transform_indices = @transform_3, window_bounds = array<i64: 1, 128>}, {pipeline_mode = #tpu.pipeline_mode<synchronous>, transform_indices = @transform_4, window_bounds = array<i64: 9, 128>}, {pipeline_mode = #tpu.pipeline_mode<synchronous>, transform_indices = @transform_5, window_bounds = array<i64: 1, 128>}, {pipeline_mode = #tpu.pipeline_mode<synchronous>, transform_indices = @transform_6, window_bounds = array<i64: 128, 128>}, {pipeline_mode = #tpu.pipeline_mode<synchronous>, transform_indices = @transform_7, window_bounds = array<i64: 1, 128>}, {pipeline_mode = #tpu.pipeline_mode<synchronous>, transform_indices = @transform_8, window_bounds = array<i64: 128, 128>}, {pipeline_mode = #tpu.pipeline_mode<synchronous>, transform_indices = @transform_9, window_bounds = array<i64: 1, 128>}, {pipeline_mode = #tpu.pipeline_mode<synchronous>, transform_indices = @transform_10, window_bounds = array<i64: 128, 128>}, {pipeline_mode = #tpu.pipeline_mode<synchronous>, transform_indices = @transform_11, window_bounds = array<i64: 1, 128>}, {transform_indices = @transform_12, window_bounds = array<i64: 1, 1, 128>}, {transform_indices = @transform_13, window_bounds = array<i64: 1, 64, 128>}]} {
    %c0 = arith.constant 0 : index
    %c0_0 = arith.constant 0 : index
    %c0_1 = arith.constant 0 : index
    %c0_2 = arith.constant 0 : index
    %0 = vector.load %arg2[%c0, %c0_0, %c0_1, %c0_2] : memref<1x8x8x128xbf16, #tpu.memory_space<vmem>>, vector<1x8x8x128xbf16>
    %1 = vector.shape_cast %0 : vector<1x8x8x128xbf16> to vector<64x128xbf16>
    %c0_3 = arith.constant 0 : index
    %c0_4 = arith.constant 0 : index
    %2 = vector.load %arg3[%c0_3, %c0_4] : memref<128x128xbf16, #tpu.memory_space<vmem>>, vector<128x128xbf16>
    %cst = arith.constant dense<0.000000e+00> : vector<64x128xf32>
    %3 = tpu.matmul %1, %2, %cst {dimension_numbers = #tpu.dot_dimension_numbers<[1], [0], [0], [1], [0, 0, 1, 1], [], []>} : vector<64x128xbf16>, vector<128x128xbf16>, vector<64x128xf32> -> vector<64x128xf32>
    %c0_5 = arith.constant 0 : index
    %c0_6 = arith.constant 0 : index
    %4 = vector.load %arg4[%c0_5, %c0_6] : memref<1x128xf32, #tpu.memory_space<vmem>>, vector<1x128xf32>
    %5 = vector.broadcast %4 : vector<1x128xf32> to vector<64x128xf32>
    %6 = arith.addf %3, %5 : vector<64x128xf32>
    %cst_7 = arith.constant 5.000000e-01 : f32
    %7 = vector.broadcast %cst_7 : f32 to vector<64x128xf32>
    %8 = arith.mulf %7, %6 : vector<64x128xf32>
    %cst_8 = arith.constant 0.707106769 : f32
    %9 = vector.broadcast %cst_8 : f32 to vector<64x128xf32>
    %10 = arith.mulf %6, %9 : vector<64x128xf32>
    %11 = math.erf %10 : vector<64x128xf32>
    %cst_9 = arith.constant 1.000000e+00 : f32
    %12 = vector.broadcast %cst_9 : f32 to vector<64x128xf32>
    %13 = arith.addf %12, %11 : vector<64x128xf32>
    %14 = arith.mulf %8, %13 : vector<64x128xf32>
    %15 = vector.shape_cast %14 : vector<64x128xf32> to vector<1x8x8x128xf32>
    %c0_10 = arith.constant 0 : index
    %c0_11 = arith.constant 0 : index
    %16 = vector.load %arg5[%c0_10, %c0_11] : memref<9x128xbf16, #tpu.memory_space<vmem>>, vector<9x128xbf16>
    %17 = arith.extf %16 : vector<9x128xbf16> to vector<9x128xf32>
    %cst_12 = arith.constant 0.000000e+00 : f32
    %18 = vector.broadcast %cst_12 : f32 to vector<1x1x8x128xf32>
    %cst_13 = arith.constant 0.000000e+00 : f32
    %19 = vector.broadcast %cst_13 : f32 to vector<1x8x1x128xf32>
    %cst_14 = arith.constant 0.000000e+00 : f32
    %20 = vector.broadcast %cst_14 : f32 to vector<1x8x8x128xf32>
    %21 = vector.extract_strided_slice %15 {offsets = [0, 0, 0, 0], sizes = [1, 7, 8, 128], strides = [1, 1, 1, 1]} : vector<1x8x8x128xf32> to vector<1x7x8x128xf32>
    %22 = tpu.concatenate %18, %21 in 1 : vector<1x1x8x128xf32>, vector<1x7x8x128xf32> -> vector<1x8x8x128xf32>
    %23 = vector.extract_strided_slice %22 {offsets = [0, 0, 0, 0], sizes = [1, 8, 7, 128], strides = [1, 1, 1, 1]} : vector<1x8x8x128xf32> to vector<1x8x7x128xf32>
    %24 = tpu.concatenate %19, %23 in 2 : vector<1x8x1x128xf32>, vector<1x8x7x128xf32> -> vector<1x8x8x128xf32>
    %25 = vector.extract_strided_slice %17 {offsets = [0, 0], sizes = [1, 128], strides = [1, 1]} : vector<9x128xf32> to vector<1x128xf32>
    %26 = vector.shape_cast %25 : vector<1x128xf32> to vector<128xf32>
    %27 = vector.shape_cast %26 : vector<128xf32> to vector<1x1x1x128xf32>
    %28 = vector.broadcast %27 : vector<1x1x1x128xf32> to vector<1x8x8x128xf32>
    %29 = arith.mulf %24, %28 : vector<1x8x8x128xf32>
    %30 = arith.addf %20, %29 : vector<1x8x8x128xf32>
    %31 = vector.extract_strided_slice %17 {offsets = [1, 0], sizes = [1, 128], strides = [1, 1]} : vector<9x128xf32> to vector<1x128xf32>
    %32 = vector.shape_cast %31 : vector<1x128xf32> to vector<128xf32>
    %33 = vector.shape_cast %32 : vector<128xf32> to vector<1x1x1x128xf32>
    %34 = vector.broadcast %33 : vector<1x1x1x128xf32> to vector<1x8x8x128xf32>
    %35 = arith.mulf %22, %34 : vector<1x8x8x128xf32>
    %36 = arith.addf %30, %35 : vector<1x8x8x128xf32>
    %37 = vector.extract_strided_slice %22 {offsets = [0, 0, 1, 0], sizes = [1, 8, 7, 128], strides = [1, 1, 1, 1]} : vector<1x8x8x128xf32> to vector<1x8x7x128xf32>
    %38 = tpu.concatenate %37, %19 in 2 : vector<1x8x7x128xf32>, vector<1x8x1x128xf32> -> vector<1x8x8x128xf32>
    %39 = vector.extract_strided_slice %17 {offsets = [2, 0], sizes = [1, 128], strides = [1, 1]} : vector<9x128xf32> to vector<1x128xf32>
    %40 = vector.shape_cast %39 : vector<1x128xf32> to vector<128xf32>
    %41 = vector.shape_cast %40 : vector<128xf32> to vector<1x1x1x128xf32>
    %42 = vector.broadcast %41 : vector<1x1x1x128xf32> to vector<1x8x8x128xf32>
    %43 = arith.mulf %38, %42 : vector<1x8x8x128xf32>
    %44 = arith.addf %36, %43 : vector<1x8x8x128xf32>
    %45 = vector.extract_strided_slice %15 {offsets = [0, 0, 0, 0], sizes = [1, 8, 7, 128], strides = [1, 1, 1, 1]} : vector<1x8x8x128xf32> to vector<1x8x7x128xf32>
    %46 = tpu.concatenate %19, %45 in 2 : vector<1x8x1x128xf32>, vector<1x8x7x128xf32> -> vector<1x8x8x128xf32>
    %47 = vector.extract_strided_slice %17 {offsets = [3, 0], sizes = [1, 128], strides = [1, 1]} : vector<9x128xf32> to vector<1x128xf32>
    %48 = vector.shape_cast %47 : vector<1x128xf32> to vector<128xf32>
    %49 = vector.shape_cast %48 : vector<128xf32> to vector<1x1x1x128xf32>
    %50 = vector.broadcast %49 : vector<1x1x1x128xf32> to vector<1x8x8x128xf32>
    %51 = arith.mulf %46, %50 : vector<1x8x8x128xf32>
    %52 = arith.addf %44, %51 : vector<1x8x8x128xf32>
    %53 = vector.extract_strided_slice %17 {offsets = [4, 0], sizes = [1, 128], strides = [1, 1]} : vector<9x128xf32> to vector<1x128xf32>
    %54 = vector.shape_cast %53 : vector<1x128xf32> to vector<128xf32>
    %55 = vector.shape_cast %54 : vector<128xf32> to vector<1x1x1x128xf32>
    %56 = vector.broadcast %55 : vector<1x1x1x128xf32> to vector<1x8x8x128xf32>
    %57 = arith.mulf %15, %56 : vector<1x8x8x128xf32>
    %58 = arith.addf %52, %57 : vector<1x8x8x128xf32>
    %59 = vector.extract_strided_slice %15 {offsets = [0, 0, 1, 0], sizes = [1, 8, 7, 128], strides = [1, 1, 1, 1]} : vector<1x8x8x128xf32> to vector<1x8x7x128xf32>
    %60 = tpu.concatenate %59, %19 in 2 : vector<1x8x7x128xf32>, vector<1x8x1x128xf32> -> vector<1x8x8x128xf32>
    %61 = vector.extract_strided_slice %17 {offsets = [5, 0], sizes = [1, 128], strides = [1, 1]} : vector<9x128xf32> to vector<1x128xf32>
    %62 = vector.shape_cast %61 : vector<1x128xf32> to vector<128xf32>
    %63 = vector.shape_cast %62 : vector<128xf32> to vector<1x1x1x128xf32>
    %64 = vector.broadcast %63 : vector<1x1x1x128xf32> to vector<1x8x8x128xf32>
    %65 = arith.mulf %60, %64 : vector<1x8x8x128xf32>
    %66 = arith.addf %58, %65 : vector<1x8x8x128xf32>
    %67 = vector.extract_strided_slice %15 {offsets = [0, 1, 0, 0], sizes = [1, 7, 8, 128], strides = [1, 1, 1, 1]} : vector<1x8x8x128xf32> to vector<1x7x8x128xf32>
    %68 = tpu.concatenate %67, %18 in 1 : vector<1x7x8x128xf32>, vector<1x1x8x128xf32> -> vector<1x8x8x128xf32>
    %69 = vector.extract_strided_slice %68 {offsets = [0, 0, 0, 0], sizes = [1, 8, 7, 128], strides = [1, 1, 1, 1]} : vector<1x8x8x128xf32> to vector<1x8x7x128xf32>
    %70 = tpu.concatenate %19, %69 in 2 : vector<1x8x1x128xf32>, vector<1x8x7x128xf32> -> vector<1x8x8x128xf32>
    %71 = vector.extract_strided_slice %17 {offsets = [6, 0], sizes = [1, 128], strides = [1, 1]} : vector<9x128xf32> to vector<1x128xf32>
    %72 = vector.shape_cast %71 : vector<1x128xf32> to vector<128xf32>
    %73 = vector.shape_cast %72 : vector<128xf32> to vector<1x1x1x128xf32>
    %74 = vector.broadcast %73 : vector<1x1x1x128xf32> to vector<1x8x8x128xf32>
    %75 = arith.mulf %70, %74 : vector<1x8x8x128xf32>
    %76 = arith.addf %66, %75 : vector<1x8x8x128xf32>
    %77 = vector.extract_strided_slice %17 {offsets = [7, 0], sizes = [1, 128], strides = [1, 1]} : vector<9x128xf32> to vector<1x128xf32>
    %78 = vector.shape_cast %77 : vector<1x128xf32> to vector<128xf32>
    %79 = vector.shape_cast %78 : vector<128xf32> to vector<1x1x1x128xf32>
    %80 = vector.broadcast %79 : vector<1x1x1x128xf32> to vector<1x8x8x128xf32>
    %81 = arith.mulf %68, %80 : vector<1x8x8x128xf32>
    %82 = arith.addf %76, %81 : vector<1x8x8x128xf32>
    %83 = vector.extract_strided_slice %68 {offsets = [0, 0, 1, 0], sizes = [1, 8, 7, 128], strides = [1, 1, 1, 1]} : vector<1x8x8x128xf32> to vector<1x8x7x128xf32>
    %84 = tpu.concatenate %83, %19 in 2 : vector<1x8x7x128xf32>, vector<1x8x1x128xf32> -> vector<1x8x8x128xf32>
    %85 = vector.extract_strided_slice %17 {offsets = [8, 0], sizes = [1, 128], strides = [1, 1]} : vector<9x128xf32> to vector<1x128xf32>
    %86 = vector.shape_cast %85 : vector<1x128xf32> to vector<128xf32>
    %87 = vector.shape_cast %86 : vector<128xf32> to vector<1x1x1x128xf32>
    %88 = vector.broadcast %87 : vector<1x1x1x128xf32> to vector<1x8x8x128xf32>
    %89 = arith.mulf %84, %88 : vector<1x8x8x128xf32>
    %90 = arith.addf %82, %89 : vector<1x8x8x128xf32>
    %91 = vector.shape_cast %90 : vector<1x8x8x128xf32> to vector<64x128xf32>
    %c0_15 = arith.constant 0 : index
    %c0_16 = arith.constant 0 : index
    %92 = vector.load %arg6[%c0_15, %c0_16] : memref<1x128xf32, #tpu.memory_space<vmem>>, vector<1x128xf32>
    %93 = vector.broadcast %92 : vector<1x128xf32> to vector<64x128xf32>
    %94 = arith.addf %91, %93 : vector<64x128xf32>
    %cst_17 = arith.constant 5.000000e-01 : f32
    %95 = vector.broadcast %cst_17 : f32 to vector<64x128xf32>
    %96 = arith.mulf %95, %94 : vector<64x128xf32>
    %cst_18 = arith.constant 0.707106769 : f32
    %97 = vector.broadcast %cst_18 : f32 to vector<64x128xf32>
    %98 = arith.mulf %94, %97 : vector<64x128xf32>
    %99 = math.erf %98 : vector<64x128xf32>
    %cst_19 = arith.constant 1.000000e+00 : f32
    %100 = vector.broadcast %cst_19 : f32 to vector<64x128xf32>
    %101 = arith.addf %100, %99 : vector<64x128xf32>
    %102 = arith.mulf %96, %101 : vector<64x128xf32>
    %103 = arith.addf %14, %102 : vector<64x128xf32>
    %104 = arith.truncf %103 : vector<64x128xf32> to vector<64x128xbf16>
    %c0_20 = arith.constant 0 : index
    %c0_21 = arith.constant 0 : index
    %105 = vector.load %arg7[%c0_20, %c0_21] : memref<128x128xbf16, #tpu.memory_space<vmem>>, vector<128x128xbf16>
    %cst_22 = arith.constant dense<0.000000e+00> : vector<64x128xf32>
    %106 = tpu.matmul %104, %105, %cst_22 {dimension_numbers = #tpu.dot_dimension_numbers<[1], [0], [0], [1], [0, 0, 1, 1], [], []>} : vector<64x128xbf16>, vector<128x128xbf16>, vector<64x128xf32> -> vector<64x128xf32>
    %c0_23 = arith.constant 0 : index
    %c0_24 = arith.constant 0 : index
    %107 = vector.load %arg8[%c0_23, %c0_24] : memref<1x128xf32, #tpu.memory_space<vmem>>, vector<1x128xf32>
    %108 = vector.broadcast %107 : vector<1x128xf32> to vector<64x128xf32>
    %109 = arith.addf %106, %108 : vector<64x128xf32>
    %110 = vector.shape_cast %109 : vector<64x128xf32> to vector<1x64x128xf32>
    %cst_25 = arith.constant dense<0.000000e+00> : vector<1x128xf32>
    %111 = vector.multi_reduction <add>, %110, %cst_25 [1] : vector<1x64x128xf32> to vector<1x128xf32>
    %cst_26 = arith.constant 6.400000e+01 : f32
    %112 = vector.broadcast %cst_26 : f32 to vector<1x128xf32>
    %113 = arith.divf %111, %112 : vector<1x128xf32>
    %114 = arith.truncf %113 : vector<1x128xf32> to vector<1x128xbf16>
    %c0_27 = arith.constant 0 : index
    %c0_28 = arith.constant 0 : index
    %115 = vector.load %arg9[%c0_27, %c0_28] : memref<128x128xbf16, #tpu.memory_space<vmem>>, vector<128x128xbf16>
    %cst_29 = arith.constant dense<0.000000e+00> : vector<1x128xf32>
    %116 = tpu.matmul %114, %115, %cst_29 {dimension_numbers = #tpu.dot_dimension_numbers<[1], [0], [0], [1], [0, 0, 1, 1], [], []>} : vector<1x128xbf16>, vector<128x128xbf16>, vector<1x128xf32> -> vector<1x128xf32>
    %c0_30 = arith.constant 0 : index
    %c0_31 = arith.constant 0 : index
    %117 = vector.load %arg10[%c0_30, %c0_31] : memref<1x128xf32, #tpu.memory_space<vmem>>, vector<1x128xf32>
    %118 = arith.addf %116, %117 : vector<1x128xf32>
    %cst_32 = arith.constant 5.000000e-01 : f32
    %119 = vector.broadcast %cst_32 : f32 to vector<1x128xf32>
    %120 = arith.mulf %119, %118 : vector<1x128xf32>
    %cst_33 = arith.constant 0.707106769 : f32
    %121 = vector.broadcast %cst_33 : f32 to vector<1x128xf32>
    %122 = arith.mulf %118, %121 : vector<1x128xf32>
    %123 = math.erf %122 : vector<1x128xf32>
    %cst_34 = arith.constant 1.000000e+00 : f32
    %124 = vector.broadcast %cst_34 : f32 to vector<1x128xf32>
    %125 = arith.addf %124, %123 : vector<1x128xf32>
    %126 = arith.mulf %120, %125 : vector<1x128xf32>
    %127 = arith.truncf %126 : vector<1x128xf32> to vector<1x128xbf16>
    %c0_35 = arith.constant 0 : index
    %c0_36 = arith.constant 0 : index
    %128 = vector.load %arg11[%c0_35, %c0_36] : memref<128x128xbf16, #tpu.memory_space<vmem>>, vector<128x128xbf16>
    %cst_37 = arith.constant dense<0.000000e+00> : vector<1x128xf32>
    %129 = tpu.matmul %127, %128, %cst_37 {dimension_numbers = #tpu.dot_dimension_numbers<[1], [0], [0], [1], [0, 0, 1, 1], [], []>} : vector<1x128xbf16>, vector<128x128xbf16>, vector<1x128xf32> -> vector<1x128xf32>
    %c0_38 = arith.constant 0 : index
    %c0_39 = arith.constant 0 : index
    %130 = vector.load %arg12[%c0_38, %c0_39] : memref<1x128xf32, #tpu.memory_space<vmem>>, vector<1x128xf32>
    %131 = arith.addf %129, %130 : vector<1x128xf32>
    %c0_40 = arith.constant 0 : index
    %c0_41 = arith.constant 0 : index
    %c0_42 = arith.constant 0 : index
    %132 = vector.load %arg1[%c0_40, %c0_41, %c0_42] : memref<1x1x128xbf16, #tpu.memory_space<vmem>>, vector<1x1x128xbf16>
    %133 = arith.extf %132 : vector<1x1x128xbf16> to vector<1x1x128xf32>
    %134 = vector.shape_cast %131 : vector<1x128xf32> to vector<1x1x128xf32>
    %135 = arith.mulf %133, %134 : vector<1x1x128xf32>
    %c0_43 = arith.constant 0 : index
    %c0_44 = arith.constant 0 : index
    %c0_45 = arith.constant 0 : index
    %136 = vector.load %arg13[%c0_43, %c0_44, %c0_45] : memref<1x1x128xf32, #tpu.memory_space<vmem>>, vector<1x1x128xf32>
    tpu.vector_store %arg13[%c0_43, %c0_44, %c0_45], %135 {strides = array<i32>} : memref<1x1x128xf32, #tpu.memory_space<vmem>>, vector<1x1x128xf32>,
    %137 = vector.shape_cast %109 : vector<64x128xf32> to vector<1x64x128xf32>
    %c0_46 = arith.constant 0 : index
    %c0_47 = arith.constant 0 : index
    %c0_48 = arith.constant 0 : index
    %138 = vector.load %arg14[%c0_46, %c0_47, %c0_48] : memref<1x64x128xf32, #tpu.memory_space<vmem>>, vector<1x64x128xf32>
    tpu.vector_store %arg14[%c0_46, %c0_47, %c0_48], %137 {strides = array<i32>} : memref<1x64x128xf32, #tpu.memory_space<vmem>>, vector<1x64x128xf32>,
    return
  }
  func.func @transform_0(%arg0: i32) -> (i32, i32, i32) {
    %c0_i32 = arith.constant 0 : i32
    %c0_i32_0 = arith.constant 0 : i32
    %c0_i32_1 = arith.constant 0 : i32
    return %arg0, %c0_i32, %c0_i32_0 : i32, i32, i32
  }
  func.func @transform_1(%arg0: i32) -> (i32, i32, i32, i32) {
    %c0_i32 = arith.constant 0 : i32
    %c0_i32_0 = arith.constant 0 : i32
    %c0_i32_1 = arith.constant 0 : i32
    %c0_i32_2 = arith.constant 0 : i32
    return %arg0, %c0_i32, %c0_i32_0, %c0_i32_1 : i32, i32, i32, i32
  }
  func.func @transform_2(%arg0: i32) -> (i32, i32) {
    %c0_i32 = arith.constant 0 : i32
    %c0_i32_0 = arith.constant 0 : i32
    %c0_i32_1 = arith.constant 0 : i32
    return %c0_i32, %c0_i32_0 : i32, i32
  }
  func.func @transform_3(%arg0: i32) -> (i32, i32) {
    %c0_i32 = arith.constant 0 : i32
    %c0_i32_0 = arith.constant 0 : i32
    %c0_i32_1 = arith.constant 0 : i32
    return %c0_i32, %c0_i32_0 : i32, i32
  }
  func.func @transform_4(%arg0: i32) -> (i32, i32) {
    %c0_i32 = arith.constant 0 : i32
    %c0_i32_0 = arith.constant 0 : i32
    %c0_i32_1 = arith.constant 0 : i32
    return %c0_i32, %c0_i32_0 : i32, i32
  }
  func.func @transform_5(%arg0: i32) -> (i32, i32) {
    %c0_i32 = arith.constant 0 : i32
    %c0_i32_0 = arith.constant 0 : i32
    %c0_i32_1 = arith.constant 0 : i32
    return %c0_i32, %c0_i32_0 : i32, i32
  }
  func.func @transform_6(%arg0: i32) -> (i32, i32) {
    %c0_i32 = arith.constant 0 : i32
    %c0_i32_0 = arith.constant 0 : i32
    %c0_i32_1 = arith.constant 0 : i32
    return %c0_i32, %c0_i32_0 : i32, i32
  }
  func.func @transform_7(%arg0: i32) -> (i32, i32) {
    %c0_i32 = arith.constant 0 : i32
    %c0_i32_0 = arith.constant 0 : i32
    %c0_i32_1 = arith.constant 0 : i32
    return %c0_i32, %c0_i32_0 : i32, i32
  }
  func.func @transform_8(%arg0: i32) -> (i32, i32) {
    %c0_i32 = arith.constant 0 : i32
    %c0_i32_0 = arith.constant 0 : i32
    %c0_i32_1 = arith.constant 0 : i32
    return %c0_i32, %c0_i32_0 : i32, i32
  }
  func.func @transform_9(%arg0: i32) -> (i32, i32) {
    %c0_i32 = arith.constant 0 : i32
    %c0_i32_0 = arith.constant 0 : i32
    %c0_i32_1 = arith.constant 0 : i32
    return %c0_i32, %c0_i32_0 : i32, i32
  }
  func.func @transform_10(%arg0: i32) -> (i32, i32) {
    %c0_i32 = arith.constant 0 : i32
    %c0_i32_0 = arith.constant 0 : i32
    %c0_i32_1 = arith.constant 0 : i32
    return %c0_i32, %c0_i32_0 : i32, i32
  }
  func.func @transform_11(%arg0: i32) -> (i32, i32) {
    %c0_i32 = arith.constant 0 : i32
    %c0_i32_0 = arith.constant 0 : i32
    %c0_i32_1 = arith.constant 0 : i32
    return %c0_i32, %c0_i32_0 : i32, i32
  }
  func.func @transform_12(%arg0: i32) -> (i32, i32, i32) {
    %c0_i32 = arith.constant 0 : i32
    %c0_i32_0 = arith.constant 0 : i32
    %c0_i32_1 = arith.constant 0 : i32
    return %arg0, %c0_i32, %c0_i32_0 : i32, i32, i32
  }
  func.func @transform_13(%arg0: i32) -> (i32, i32, i32) {
    %c0_i32 = arith.constant 0 : i32
    %c0_i32_0 = arith.constant 0 : i32
    %c0_i32_1 = arith.constant 0 : i32
    return %arg0, %c0_i32, %c0_i32_0 : i32, i32, i32
  }
}

</mosaic_0001>

<llo_original>
// kernel: tpu_custom_call.1
$region0: #{tpu_custom_call.1}
  #allocation0 [shape = 'u32[]', space=smem, size = 0x4, offset = 0x4, fixed_abs, tag = 'smem constant byte address 0x4 - core index']
  #allocation1 [shape = 'u32[72,128]{1,0:T(1,128)}', space=vmem, size = 0x9000, scoped, tag = 'internal scratch']
  %s0 = inlined_call_operand.vmem [shape: bf16[2,1,128], index: 0, kind: input, shape index: {}]
  %s1 = inlined_call_operand.hbm [shape: bf16[2,8,8,128], index: 1, kind: input, shape index: {}]
  %s2 = inlined_call_operand.hbm [shape: bf16[128,128], index: 2, kind: input, shape index: {}]
  %s3 = inlined_call_operand.vmem [shape: f32[1,128], index: 3, kind: input, shape index: {}]
  %s4 = inlined_call_operand.hbm [shape: bf16[9,128], index: 4, kind: input, shape index: {}]
  %s5 = inlined_call_operand.vmem [shape: f32[1,128], index: 5, kind: input, shape index: {}]
  %s6 = inlined_call_operand.hbm [shape: bf16[128,128], index: 6, kind: input, shape index: {}]
  %s7 = inlined_call_operand.vmem [shape: f32[1,128], index: 7, kind: input, shape index: {}]
  %s8 = inlined_call_operand.hbm [shape: bf16[128,128], index: 8, kind: input, shape index: {}]
  %s9 = inlined_call_operand.vmem [shape: f32[1,128], index: 9, kind: input, shape index: {}]
  %s10 = inlined_call_operand.hbm [shape: bf16[128,128], index: 10, kind: input, shape index: {}]
  %s11 = inlined_call_operand.vmem [shape: f32[1,128], index: 11, kind: input, shape index: {}]
  %s12 = inlined_call_operand.hbm [shape: f32[2,1,128], index: 12, kind: output, shape index: {0}]
  %s13 = inlined_call_operand.hbm [shape: f32[2,64,128], index: 13, kind: output, shape index: {1}]
  %14 = xla_tuple %s12, %s13
  %s15 = sld [smem:[#allocation0]]
  $region113: #{tpu_custom_call.1} parent=0
    _
  %s17 = ssub.s32 1, %s15
  %s18 = scalar_select 0, %s17, %s15
  $region1: #{tpu_custom_call.1} parent=0
    #allocation2 [shape = 'u8[32768]{0}', space=vmem, size = 0x8000, scoped, tag = 'input window, operand 1']
    #allocation3 [shape = 's32[2]{0}', space=sflag, size = 0x8, scoped, tag = 'scoped memory for tpu_custom_call.1']
    #allocation4 [shape = 's32[2]{0}', space=sflag, size = 0x8, scoped, tag = 'scoped memory for tpu_custom_call.1']
    #allocation5 [shape = 'u8[32768]{0}', space=vmem, size = 0x8000, scoped, tag = 'input window, operand 2, single buffered']
    #allocation6 [shape = 's32[1]{0}', space=sflag, size = 0x4, scoped, tag = 'scoped memory for tpu_custom_call.1']
    #allocation7 [shape = 'u8[4096]{0}', space=vmem, size = 0x1000, scoped, tag = 'input window, operand 4, single buffered']
    #allocation8 [shape = 'u8[32768]{0}', space=vmem, size = 0x8000, scoped, tag = 'input window, operand 6, single buffered']
    #allocation9 [shape = 's32[1]{0}', space=sflag, size = 0x4, scoped, tag = 'scoped memory for tpu_custom_call.1']
    #allocation10 [shape = 'u8[32768]{0}', space=vmem, size = 0x8000, scoped, tag = 'input window, operand 8, single buffered']
    #allocation11 [shape = 'u8[32768]{0}', space=vmem, size = 0x8000, scoped, tag = 'input window, operand 10, single buffered']
    #allocation12 [shape = 's32[1]{0}', space=sflag, size = 0x4, scoped, tag = 'scoped memory for tpu_custom_call.1']
    #allocation13 [shape = 'u8[1024]{0}', space=vmem, size = 0x400, scoped, tag = 'output window, operand 0']
    #allocation14 [shape = 'u8[65536]{0}', space=vmem, size = 0x10000, scoped, tag = 'output window, operand 1']
    #allocation15 [shape = 's32[2]{0}', space=sflag, size = 0x8, scoped, tag = 'scoped memory for tpu_custom_call.1']
    %19 = vsyncpa [#allocation3], 0
    %s20 = scalar_lea.sflag [#allocation3], 1
    %21 = vsyncpa %s20, 0
    %22 = vsyncpa [#allocation6], 0
    %23 = vsyncpa [#allocation9], 0
    %24 = vsyncpa [#allocation12], 0
    %25 = vsyncpa [#allocation4], 0
    %s26 = scalar_lea.sflag [#allocation4], 1
    %27 = vsyncpa %s26, 0
    %28 = vsyncpa [#allocation15], 0
    %s29 = scalar_lea.sflag [#allocation15], 1
    %30 = vsyncpa %s29, 0
    loop: start=0, step=1, limit=4
    $region2: #{tpu_custom_call.1} parent=1 // loop_pre_header
      _
    $region3: #{tpu_custom_call.1} parent=1 // loop_header
      %s32 = sphi 0, %s36
      %p33 = scmp.ge.s32.totalorder %s32, 4
      %s42 = sphi 0, %s44
      %s45 = sphi 0, %s42
      %s46 = sphi 0, %s45
      %s62 = sphi 0, %s46
      %s68 = sphi 0, %s70
      %s71 = sphi 0, %s68
      %s72 = sphi 0, %s71
      %s88 = sphi 0, %s72
      %s92 = sphi 0, %s92
      %s94 = sphi 0, %s92
      %s95 = sphi 0, %s94
      %s109 = sphi 0, %s95
      %s113 = sphi 0, %s113
      %s115 = sphi 0, %s113
      %s116 = sphi 0, %s115
      %s130 = sphi 0, %s116
      %s134 = sphi 0, %s134
      %s136 = sphi 0, %s134
      %s137 = sphi 0, %s136
      %s151 = sphi 0, %s137
      %s155 = sphi 0, %s155
      %s157 = sphi 0, %s155
      %s158 = sphi 0, %s157
      %s172 = sphi 0, %s158
      %s176 = sphi 0, %s176
      %s178 = sphi 0, %s176
      %s179 = sphi 0, %s178
      %s193 = sphi 0, %s179
      %s197 = sphi 0, %s197
      %s199 = sphi 0, %s197
      %s200 = sphi 0, %s199
      %s214 = sphi 0, %s200
      %s218 = sphi 0, %s218
      %s220 = sphi 0, %s218
      %s221 = sphi 0, %s220
      %s235 = sphi 0, %s221
      %s239 = sphi 0, %s239
      %s241 = sphi 0, %s239
      %s242 = sphi 0, %s241
      %s256 = sphi 0, %s242
      %s260 = sphi 0, %s260
      %s262 = sphi 0, %s260
      %s263 = sphi 0, %s262
      %s277 = sphi 0, %s263
      %s281 = sphi 0, %s281
      %s283 = sphi 0, %s281
      %s284 = sphi 0, %s283
      %s298 = sphi 0, %s284
      %s304 = sphi 0, %s306
      %s307 = sphi 0, %s304
      %s308 = sphi 0, %s307
      %s324 = sphi 0, %s308
      %s330 = sphi 0, %s332
      %s333 = sphi 0, %s330
      %s334 = sphi 0, %s333
      %s350 = sphi 0, %s334
    $region4: #{tpu_custom_call.1} parent=1 // loop_header_branch
      %35 = sbr.rel (%p33) target = $region8
    $region5: #{tpu_custom_call.1} parent=1 // loop_body
      %s37 = ssub.s32 %s32, 1
      %s38 = ssub.s32 %s32, 2
      %s39 = sadd.s32 %s32, 1
      %s40 = ssub.s32 %s32, %s39
      %p41 = scmp.eq.s32.totalorder %s40, 0
      %s43 = sadd.s32 %s42, 1
      %s44 = scalar_select %p41, %s42, %s43
      %p47 = pneg %p41
      %p48 = scmp.eq.s32.totalorder %s32, 1
      %p49 = por %p47, %p48
      %p50 = scmp.ne.s32.totalorder %s42, %s45
      %p51 = scmp.eq.s32.totalorder %s32, 0
      %p52 = por %p50, %p51
      %p53 = scmp.ne.s32.totalorder %s42, %s45
      %p54 = scmp.eq.s32.totalorder %s37, 1
      %p55 = por %p53, %p54
      %p56 = scmp.ne.s32.totalorder %s45, %s46
      %p57 = scmp.eq.s32.totalorder %s37, 0
      %p58 = por %p56, %p57
      %p59 = scmp.ne.s32.totalorder %s45, %s46
      %p60 = scmp.eq.s32.totalorder %s38, 1
      %p61 = por %p59, %p60
      %p63 = scmp.ne.s32.totalorder %s46, %s62
      %p64 = scmp.eq.s32.totalorder %s38, 0
      %p65 = por %p63, %p64
      %s66 = ssub.s32 %s32, %s39
      %p67 = scmp.eq.s32.totalorder %s66, 0
      %s69 = sadd.s32 %s68, 1
      %s70 = scalar_select %p67, %s68, %s69
      %p73 = pneg %p67
      %p74 = scmp.eq.s32.totalorder %s32, 1
      %p75 = por %p73, %p74
      %p76 = scmp.ne.s32.totalorder %s68, %s71
      %p77 = scmp.eq.s32.totalorder %s32, 0
      %p78 = por %p76, %p77
      %p79 = scmp.ne.s32.totalorder %s68, %s71
      %p80 = scmp.eq.s32.totalorder %s37, 1
      %p81 = por %p79, %p80
      %p82 = scmp.ne.s32.totalorder %s71, %s72
      %p83 = scmp.eq.s32.totalorder %s37, 0
      %p84 = por %p82, %p83
      %p85 = scmp.ne.s32.totalorder %s71, %s72
      %p86 = scmp.eq.s32.totalorder %s38, 1
      %p87 = por %p85, %p86
      %p89 = scmp.ne.s32.totalorder %s72, %s88
      %p90 = scmp.eq.s32.totalorder %s38, 0
      %p91 = por %p89, %p90
      %s93 = sadd.s32 %s92, 1
      %p96 = scmp.eq.s32.totalorder %s32, 1
      %p97 = scmp.ne.s32.totalorder %s92, %s94
      %p98 = scmp.eq.s32.totalorder %s32, 0
      %p99 = por %p97, %p98
      %p100 = scmp.ne.s32.totalorder %s92, %s94
      %p101 = scmp.eq.s32.totalorder %s37, 1
      %p102 = por %p100, %p101
      %p103 = scmp.ne.s32.totalorder %s94, %s95
      %p104 = scmp.eq.s32.totalorder %s37, 0
      %p105 = por %p103, %p104
      %p106 = scmp.ne.s32.totalorder %s94, %s95
      %p107 = scmp.eq.s32.totalorder %s38, 1
      %p108 = por %p106, %p107
      %p110 = scmp.ne.s32.totalorder %s95, %s109
      %p111 = scmp.eq.s32.totalorder %s38, 0
      %p112 = por %p110, %p111
      %s114 = sadd.s32 %s113, 1
      %p117 = scmp.eq.s32.totalorder %s32, 1
      %p118 = scmp.ne.s32.totalorder %s113, %s115
      %p119 = scmp.eq.s32.totalorder %s32, 0
      %p120 = por %p118, %p119
      %p121 = scmp.ne.s32.totalorder %s113, %s115
      %p122 = scmp.eq.s32.totalorder %s37, 1
      %p123 = por %p121, %p122
      %p124 = scmp.ne.s32.totalorder %s115, %s116
      %p125 = scmp.eq.s32.totalorder %s37, 0
      %p126 = por %p124, %p125
      %p127 = scmp.ne.s32.totalorder %s115, %s116
      %p128 = scmp.eq.s32.totalorder %s38, 1
      %p129 = por %p127, %p128
      %p131 = scmp.ne.s32.totalorder %s116, %s130
      %p132 = scmp.eq.s32.totalorder %s38, 0
      %p133 = por %p131, %p132
      %s135 = sadd.s32 %s134, 1
      %p138 = scmp.eq.s32.totalorder %s32, 1
      %p139 = scmp.ne.s32.totalorder %s134, %s136
      %p140 = scmp.eq.s32.totalorder %s32, 0
      %p141 = por %p139, %p140
      %p142 = scmp.ne.s32.totalorder %s134, %s136
      %p143 = scmp.eq.s32.totalorder %s37, 1
      %p144 = por %p142, %p143
      %p145 = scmp.ne.s32.totalorder %s136, %s137
      %p146 = scmp.eq.s32.totalorder %s37, 0
      %p147 = por %p145, %p146
      %p148 = scmp.ne.s32.totalorder %s136, %s137
      %p149 = scmp.eq.s32.totalorder %s38, 1
      %p150 = por %p148, %p149
      %p152 = scmp.ne.s32.totalorder %s137, %s151
      %p153 = scmp.eq.s32.totalorder %s38, 0
      %p154 = por %p152, %p153
      %s156 = sadd.s32 %s155, 1
      %p159 = scmp.eq.s32.totalorder %s32, 1
      %p160 = scmp.ne.s32.totalorder %s155, %s157
      %p161 = scmp.eq.s32.totalorder %s32, 0
      %p162 = por %p160, %p161
      %p163 = scmp.ne.s32.totalorder %s155, %s157
      %p164 = scmp.eq.s32.totalorder %s37, 1
      %p165 = por %p163, %p164
      %p166 = scmp.ne.s32.totalorder %s157, %s158
      %p167 = scmp.eq.s32.totalorder %s37, 0
      %p168 = por %p166, %p167
      %p169 = scmp.ne.s32.totalorder %s157, %s158
      %p170 = scmp.eq.s32.totalorder %s38, 1
      %p171 = por %p169, %p170
      %p173 = scmp.ne.s32.totalorder %s158, %s172
      %p174 = scmp.eq.s32.totalorder %s38, 0
      %p175 = por %p173, %p174
      %s177 = sadd.s32 %s176, 1
      %p180 = scmp.eq.s32.totalorder %s32, 1
      %p181 = scmp.ne.s32.totalorder %s176, %s178
      %p182 = scmp.eq.s32.totalorder %s32, 0
      %p183 = por %p181, %p182
      %p184 = scmp.ne.s32.totalorder %s176, %s178
      %p185 = scmp.eq.s32.totalorder %s37, 1
      %p186 = por %p184, %p185
      %p187 = scmp.ne.s32.totalorder %s178, %s179
      %p188 = scmp.eq.s32.totalorder %s37, 0
      %p189 = por %p187, %p188
      %p190 = scmp.ne.s32.totalorder %s178, %s179
      %p191 = scmp.eq.s32.totalorder %s38, 1
      %p192 = por %p190, %p191
      %p194 = scmp.ne.s32.totalorder %s179, %s193
      %p195 = scmp.eq.s32.totalorder %s38, 0
      %p196 = por %p194, %p195
      %s198 = sadd.s32 %s197, 1
      %p201 = scmp.eq.s32.totalorder %s32, 1
      %p202 = scmp.ne.s32.totalorder %s197, %s199
      %p203 = scmp.eq.s32.totalorder %s32, 0
      %p204 = por %p202, %p203
      %p205 = scmp.ne.s32.totalorder %s197, %s199
      %p206 = scmp.eq.s32.totalorder %s37, 1
      %p207 = por %p205, %p206
      %p208 = scmp.ne.s32.totalorder %s199, %s200
      %p209 = scmp.eq.s32.totalorder %s37, 0
      %p210 = por %p208, %p209
      %p211 = scmp.ne.s32.totalorder %s199, %s200
      %p212 = scmp.eq.s32.totalorder %s38, 1
      %p213 = por %p211, %p212
      %p215 = scmp.ne.s32.totalorder %s200, %s214
      %p216 = scmp.eq.s32.totalorder %s38, 0
      %p217 = por %p215, %p216
      %s219 = sadd.s32 %s218, 1
      %p222 = scmp.eq.s32.totalorder %s32, 1
      %p223 = scmp.ne.s32.totalorder %s218, %s220
      %p224 = scmp.eq.s32.totalorder %s32, 0
      %p225 = por %p223, %p224
      %p226 = scmp.ne.s32.totalorder %s218, %s220
      %p227 = scmp.eq.s32.totalorder %s37, 1
      %p228 = por %p226, %p227
      %p229 = scmp.ne.s32.totalorder %s220, %s221
      %p230 = scmp.eq.s32.totalorder %s37, 0
      %p231 = por %p229, %p230
      %p232 = scmp.ne.s32.totalorder %s220, %s221
      %p233 = scmp.eq.s32.totalorder %s38, 1
      %p234 = por %p232, %p233
      %p236 = scmp.ne.s32.totalorder %s221, %s235
      %p237 = scmp.eq.s32.totalorder %s38, 0
      %p238 = por %p236, %p237
      %s240 = sadd.s32 %s239, 1
      %p243 = scmp.eq.s32.totalorder %s32, 1
      %p244 = scmp.ne.s32.totalorder %s239, %s241
      %p245 = scmp.eq.s32.totalorder %s32, 0
      %p246 = por %p244, %p245
      %p247 = scmp.ne.s32.totalorder %s239, %s241
      %p248 = scmp.eq.s32.totalorder %s37, 1
      %p249 = por %p247, %p248
      %p250 = scmp.ne.s32.totalorder %s241, %s242
      %p251 = scmp.eq.s32.totalorder %s37, 0
      %p252 = por %p250, %p251
      %p253 = scmp.ne.s32.totalorder %s241, %s242
      %p254 = scmp.eq.s32.totalorder %s38, 1
      %p255 = por %p253, %p254
      %p257 = scmp.ne.s32.totalorder %s242, %s256
      %p258 = scmp.eq.s32.totalorder %s38, 0
      %p259 = por %p257, %p258
      %s261 = sadd.s32 %s260, 1
      %p264 = scmp.eq.s32.totalorder %s32, 1
      %p265 = scmp.ne.s32.totalorder %s260, %s262
      %p266 = scmp.eq.s32.totalorder %s32, 0
      %p267 = por %p265, %p266
      %p268 = scmp.ne.s32.totalorder %s260, %s262
      %p269 = scmp.eq.s32.totalorder %s37, 1
      %p270 = por %p268, %p269
      %p271 = scmp.ne.s32.totalorder %s262, %s263
      %p272 = scmp.eq.s32.totalorder %s37, 0
      %p273 = por %p271, %p272
      %p274 = scmp.ne.s32.totalorder %s262, %s263
      %p275 = scmp.eq.s32.totalorder %s38, 1
      %p276 = por %p274, %p275
      %p278 = scmp.ne.s32.totalorder %s263, %s277
      %p279 = scmp.eq.s32.totalorder %s38, 0
      %p280 = por %p278, %p279
      %s282 = sadd.s32 %s281, 1
      %p285 = scmp.eq.s32.totalorder %s32, 1
      %p286 = scmp.ne.s32.totalorder %s281, %s283
      %p287 = scmp.eq.s32.totalorder %s32, 0
      %p288 = por %p286, %p287
      %p289 = scmp.ne.s32.totalorder %s281, %s283
      %p290 = scmp.eq.s32.totalorder %s37, 1
      %p291 = por %p289, %p290
      %p292 = scmp.ne.s32.totalorder %s283, %s284
      %p293 = scmp.eq.s32.totalorder %s37, 0
      %p294 = por %p292, %p293
      %p295 = scmp.ne.s32.totalorder %s283, %s284
      %p296 = scmp.eq.s32.totalorder %s38, 1
      %p297 = por %p295, %p296
      %p299 = scmp.ne.s32.totalorder %s284, %s298
      %p300 = scmp.eq.s32.totalorder %s38, 0
      %p301 = por %p299, %p300
      %s302 = ssub.s32 %s32, %s39
      %p303 = scmp.eq.s32.totalorder %s302, 0
      %s305 = sadd.s32 %s304, 1
      %s306 = scalar_select %p303, %s304, %s305
      %p309 = pneg %p303
      %p310 = scmp.eq.s32.totalorder %s32, 1
      %p311 = por %p309, %p310
      %p312 = scmp.ne.s32.totalorder %s304, %s307
      %p313 = scmp.eq.s32.totalorder %s32, 0
      %p314 = por %p312, %p313
      %p315 = scmp.ne.s32.totalorder %s304, %s307
      %p316 = scmp.eq.s32.totalorder %s37, 1
      %p317 = por %p315, %p316
      %p318 = scmp.ne.s32.totalorder %s307, %s308
      %p319 = scmp.eq.s32.totalorder %s37, 0
      %p320 = por %p318, %p319
      %p321 = scmp.ne.s32.totalorder %s307, %s308
      %p322 = scmp.eq.s32.totalorder %s38, 1
      %p323 = por %p321, %p322
      %p325 = scmp.ne.s32.totalorder %s308, %s324
      %p326 = scmp.eq.s32.totalorder %s38, 0
      %p327 = por %p325, %p326
      %s328 = ssub.s32 %s32, %s39
      %p329 = scmp.eq.s32.totalorder %s328, 0
      %s331 = sadd.s32 %s330, 1
      %s332 = scalar_select %p329, %s330, %s331
      %p335 = pneg %p329
      %p336 = scmp.eq.s32.totalorder %s32, 1
      %p337 = por %p335, %p336
      %p338 = scmp.ne.s32.totalorder %s330, %s333
      %p339 = scmp.eq.s32.totalorder %s32, 0
      %p340 = por %p338, %p339
      %p341 = scmp.ne.s32.totalorder %s330, %s333
      %p342 = scmp.eq.s32.totalorder %s37, 1
      %p343 = por %p341, %p342
      %p344 = scmp.ne.s32.totalorder %s333, %s334
      %p345 = scmp.eq.s32.totalorder %s37, 0
      %p346 = por %p344, %p345
      %p347 = scmp.ne.s32.totalorder %s333, %s334
      %p348 = scmp.eq.s32.totalorder %s38, 1
      %p349 = por %p347, %p348
      %p351 = scmp.ne.s32.totalorder %s334, %s350
      %p352 = scmp.eq.s32.totalorder %s38, 0
      %p353 = por %p351, %p352
      %p354 = scmp.le.s32.totalorder 1, %s32
      %p355 = scmp.lt.s32.totalorder %s32, 3
      %p356 = pnand %p354, %p355
      %p357 = pneg %p356
      // Predicated region
      $region9: #{tpu_custom_call.1} parent=5 // pred_check
        _
      $region10: #{tpu_custom_call.1} parent=5 // pred_check_branch
        %359 = sbr.rel (%p356) target = $region12
      $region11: #{tpu_custom_call.1} parent=5 // pred_region
        %s360 = ssub.s32 %s32, 1
        // Predicated region
        $region13: #{tpu_custom_call.1} parent=11 // pred_check
          %p361 = pneg %p105
        $region14: #{tpu_custom_call.1} parent=11 // pred_check_branch
          %363 = sbr.rel (%p361) target = $region16
        $region15: #{tpu_custom_call.1} parent=11 // pred_region
          %365 = vsyncadd [#allocation6], 0
          %s366 = sshll.u32 %s2, 4
          %s367 = int_to_ptr.hbm [resolvable:$true] %s366
          %s368 = sshll.u32 [#allocation5], 4
          %s369 = int_to_ptr.vmem [resolvable:$true] %s368
          %374 = dma.hbm_to_vmem [thread:$0]  %s367, 1024, %s369, [#allocation6], 64, 64, 4
        $region16: #{tpu_custom_call.1} parent=11 // pred_fallthru
          _
        // Predicated region
        $region17: #{tpu_custom_call.1} parent=11 // pred_check
          %p375 = pneg %p126
        $region18: #{tpu_custom_call.1} parent=11 // pred_check_branch
          %377 = sbr.rel (%p375) target = $region20
        $region19: #{tpu_custom_call.1} parent=11 // pred_region
          _
        $region20: #{tpu_custom_call.1} parent=11 // pred_fallthru
          _
        // Predicated region
        $region21: #{tpu_custom_call.1} parent=11 // pred_check
          %p378 = pneg %p147
        $region22: #{tpu_custom_call.1} parent=11 // pred_check_branch
          %380 = sbr.rel (%p378) target = $region24
        $region23: #{tpu_custom_call.1} parent=11 // pred_region
          %382 = vsyncadd [#allocation6], 0
          %s383 = sshll.u32 %s4, 4
          %s384 = int_to_ptr.hbm [resolvable:$true] %s383
          %s385 = sshll.u32 [#allocation7], 4
          %s386 = int_to_ptr.vmem [resolvable:$true] %s385
          %391 = dma.hbm_to_vmem [thread:$0]  %s384, 128, %s386, [#allocation6], 64, 64, 4
        $region24: #{tpu_custom_call.1} parent=11 // pred_fallthru
          _
        // Predicated region
        $region25: #{tpu_custom_call.1} parent=11 // pred_check
          %p392 = pneg %p168
        $region26: #{tpu_custom_call.1} parent=11 // pred_check_branch
          %394 = sbr.rel (%p392) target = $region28
        $region27: #{tpu_custom_call.1} parent=11 // pred_region
          _
        $region28: #{tpu_custom_call.1} parent=11 // pred_fallthru
          _
        // Predicated region
        $region29: #{tpu_custom_call.1} parent=11 // pred_check
          %p395 = pneg %p189
        $region30: #{tpu_custom_call.1} parent=11 // pred_check_branch
          %397 = sbr.rel (%p395) target = $region32
        $region31: #{tpu_custom_call.1} parent=11 // pred_region
          %399 = vsyncadd [#allocation9], 0
          %s400 = sshll.u32 %s6, 4
          %s401 = int_to_ptr.hbm [resolvable:$true] %s400
          %s402 = sshll.u32 [#allocation8], 4
          %s403 = int_to_ptr.vmem [resolvable:$true] %s402
          %408 = dma.hbm_to_vmem [thread:$0]  %s401, 1024, %s403, [#allocation9], 64, 64, 4
        $region32: #{tpu_custom_call.1} parent=11 // pred_fallthru
          _
        // Predicated region
        $region33: #{tpu_custom_call.1} parent=11 // pred_check
          %p409 = pneg %p210
        $region34: #{tpu_custom_call.1} parent=11 // pred_check_branch
          %411 = sbr.rel (%p409) target = $region36
        $region35: #{tpu_custom_call.1} parent=11 // pred_region
          _
        $region36: #{tpu_custom_call.1} parent=11 // pred_fallthru
          _
        // Predicated region
        $region37: #{tpu_custom_call.1} parent=11 // pred_check
          %p412 = pneg %p231
        $region38: #{tpu_custom_call.1} parent=11 // pred_check_branch
          %414 = sbr.rel (%p412) target = $region40
        $region39: #{tpu_custom_call.1} parent=11 // pred_region
          %416 = vsyncadd [#allocation9], 0
          %s417 = sshll.u32 %s8, 4
          %s418 = int_to_ptr.hbm [resolvable:$true] %s417
          %s419 = sshll.u32 [#allocation10], 4
          %s420 = int_to_ptr.vmem [resolvable:$true] %s419
          %425 = dma.hbm_to_vmem [thread:$0]  %s418, 1024, %s420, [#allocation9], 64, 64, 4
        $region40: #{tpu_custom_call.1} parent=11 // pred_fallthru
          _
        // Predicated region
        $region41: #{tpu_custom_call.1} parent=11 // pred_check
          %p426 = pneg %p252
        $region42: #{tpu_custom_call.1} parent=11 // pred_check_branch
          %428 = sbr.rel (%p426) target = $region44
        $region43: #{tpu_custom_call.1} parent=11 // pred_region
          _
        $region44: #{tpu_custom_call.1} parent=11 // pred_fallthru
          _
        // Predicated region
        $region45: #{tpu_custom_call.1} parent=11 // pred_check
          %p429 = pneg %p273
        $region46: #{tpu_custom_call.1} parent=11 // pred_check_branch
          %431 = sbr.rel (%p429) target = $region48
        $region47: #{tpu_custom_call.1} parent=11 // pred_region
          %433 = vsyncadd [#allocation12], 0
          %s434 = sshll.u32 %s10, 4
          %s435 = int_to_ptr.hbm [resolvable:$true] %s434
          %s436 = sshll.u32 [#allocation11], 4
          %s437 = int_to_ptr.vmem [resolvable:$true] %s436
          %442 = dma.hbm_to_vmem [thread:$0]  %s435, 1024, %s437, [#allocation12], 64, 64, 4
        $region48: #{tpu_custom_call.1} parent=11 // pred_fallthru
          _
        // Predicated region
        $region49: #{tpu_custom_call.1} parent=11 // pred_check
          %p443 = pneg %p294
        $region50: #{tpu_custom_call.1} parent=11 // pred_check_branch
          %445 = sbr.rel (%p443) target = $region52
        $region51: #{tpu_custom_call.1} parent=11 // pred_region
          _
        $region52: #{tpu_custom_call.1} parent=11 // pred_fallthru
          _
      $region12: #{tpu_custom_call.1} parent=5 // pred_fallthru
        _
      %p446 = scmp.lt.s32.totalorder %s32, 2
      // Predicated region
      $region53: #{tpu_custom_call.1} parent=5 // pred_check
        %p447 = pneg %p446
      $region54: #{tpu_custom_call.1} parent=5 // pred_check_branch
        %449 = sbr.rel (%p447) target = $region56
      $region55: #{tpu_custom_call.1} parent=5 // pred_region
        // Predicated region
        $region57: #{tpu_custom_call.1} parent=55 // pred_check
          %p450 = pneg %p52
        $region58: #{tpu_custom_call.1} parent=55 // pred_check_branch
          %452 = sbr.rel (%p450) target = $region60
        $region59: #{tpu_custom_call.1} parent=55 // pred_region
          %p453 = scmp.lt.s32.totalorder %s32, 1
          %s454 = scalar_select %p453, %s32, 1
          %s455 = scalar_lea.vmem %s0, %s454
        $region60: #{tpu_custom_call.1} parent=55 // pred_fallthru
          _
        // Predicated region
        $region61: #{tpu_custom_call.1} parent=55 // pred_check
          %p456 = pneg %p78
        $region62: #{tpu_custom_call.1} parent=55 // pred_check_branch
          %458 = sbr.rel (%p456) target = $region64
        $region63: #{tpu_custom_call.1} parent=55 // pred_region
          %s459 = sand.u32 %s68, 1
          %s460 = scalar_lea.sflag [#allocation3], %s459
          %s461 = sand.u32 %s68, 1
          %s462 = smul.addr %s461, 32
          %s463 = scalar_lea.vmem [#allocation2], %s462
          %465 = vsyncadd %s460, 0
          %s466 = smul.addr %s32, 8
          %s467 = smul.addr %s466, 4
          %s468 = scalar_lea.hbm %s1, %s467
          %s469 = sshll.u32 %s468, 4
          %s470 = int_to_ptr.hbm [resolvable:$true] %s469
          %s471 = sshll.u32 %s463, 4
          %s472 = int_to_ptr.vmem [resolvable:$true] %s471
          %477 = dma.hbm_to_vmem [thread:$0]  %s470, 512, %s472, %s460, 64, 64, 4
        $region64: #{tpu_custom_call.1} parent=55 // pred_fallthru
          _
      $region56: #{tpu_custom_call.1} parent=5 // pred_fallthru
        _
      %p478 = scmp.le.s32.totalorder 1, %s32
      %p479 = scmp.lt.s32.totalorder %s32, 3
      %p480 = pnand %p478, %p479
      %p481 = pneg %p480
      // Predicated region
      $region65: #{tpu_custom_call.1} parent=5 // pred_check
        _
      $region66: #{tpu_custom_call.1} parent=5 // pred_check_branch
        %483 = sbr.rel (%p480) target = $region68
      $region67: #{tpu_custom_call.1} parent=5 // pred_region
        %s484 = ssub.s32 %s32, 1
        %s485 = sand.u32 %s71, 1
        %s486 = scalar_lea.sflag [#allocation3], %s485
        %s487 = sand.u32 %s71, 1
        %s488 = smul.addr %s487, 32
        %s489 = scalar_lea.vmem [#allocation2], %s488
        // Predicated region
        $region69: #{tpu_custom_call.1} parent=67 // pred_check
          %p490 = pneg %p84
        $region70: #{tpu_custom_call.1} parent=67 // pred_check_branch
          %492 = sbr.rel (%p490) target = $region72
        $region71: #{tpu_custom_call.1} parent=67 // pred_region
          %494 = dma.done %s486, 512
        $region72: #{tpu_custom_call.1} parent=67 // pred_fallthru
          _
        // Predicated region
        $region73: #{tpu_custom_call.1} parent=67 // pred_check
          %p495 = pneg %p105
        $region74: #{tpu_custom_call.1} parent=67 // pred_check_branch
          %497 = sbr.rel (%p495) target = $region76
        $region75: #{tpu_custom_call.1} parent=67 // pred_region
          %499 = dma.done [#allocation6], 1024
        $region76: #{tpu_custom_call.1} parent=67 // pred_fallthru
          _
        // Predicated region
        $region77: #{tpu_custom_call.1} parent=67 // pred_check
          %p500 = pneg %p147
        $region78: #{tpu_custom_call.1} parent=67 // pred_check_branch
          %502 = sbr.rel (%p500) target = $region80
        $region79: #{tpu_custom_call.1} parent=67 // pred_region
          %504 = dma.done [#allocation6], 128
        $region80: #{tpu_custom_call.1} parent=67 // pred_fallthru
          _
        // Predicated region
        $region81: #{tpu_custom_call.1} parent=67 // pred_check
          %p505 = pneg %p189
        $region82: #{tpu_custom_call.1} parent=67 // pred_check_branch
          %507 = sbr.rel (%p505) target = $region84
        $region83: #{tpu_custom_call.1} parent=67 // pred_region
          %509 = dma.done [#allocation9], 1024
        $region84: #{tpu_custom_call.1} parent=67 // pred_fallthru
          _
        // Predicated region
        $region85: #{tpu_custom_call.1} parent=67 // pred_check
          %p510 = pneg %p231
        $region86: #{tpu_custom_call.1} parent=67 // pred_check_branch
          %512 = sbr.rel (%p510) target = $region88
        $region87: #{tpu_custom_call.1} parent=67 // pred_region
          %514 = dma.done [#allocation9], 1024
        $region88: #{tpu_custom_call.1} parent=67 // pred_fallthru
          _
        // Predicated region
        $region89: #{tpu_custom_call.1} parent=67 // pred_check
          %p515 = pneg %p273
        $region90: #{tpu_custom_call.1} parent=67 // pred_check_branch
          %517 = sbr.rel (%p515) target = $region92
        $region91: #{tpu_custom_call.1} parent=67 // pred_region
          %519 = dma.done [#allocation12], 1024
        $region92: #{tpu_custom_call.1} parent=67 // pred_fallthru
          _
        %p520 = scmp.lt.s32.totalorder %s37, 1
        %s521 = scalar_select %p520, %s37, 1
        %s522 = scalar_lea.vmem %s0, %s521
        %p523 = pneg %p58
        %p524 = pneg %p55
        %s525 = sand.u32 %s71, 1
        %s526 = scalar_lea.sflag [#allocation3], %s525
        %s527 = sand.u32 %s71, 1
        %s528 = smul.addr %s527, 32
        %s529 = scalar_lea.vmem [#allocation2], %s528
        %p530 = pneg %p84
        %p531 = pneg %p81
        %p532 = pneg %p105
        %p533 = pneg %p102
        %p534 = pneg %p126
        %p535 = pneg %p123
        %p536 = pneg %p147
        %p537 = pneg %p144
        %p538 = pneg %p168
        %p539 = pneg %p165
        %p540 = pneg %p189
        %p541 = pneg %p186
        %p542 = pneg %p210
        %p543 = pneg %p207
        %p544 = pneg %p231
        %p545 = pneg %p228
        %p546 = pneg %p252
        %p547 = pneg %p249
        %p548 = pneg %p273
        %p549 = pneg %p270
        %p550 = pneg %p294
        %p551 = pneg %p291
        %p552 = pneg %p320
        %p553 = pneg %p317
        %s554 = sand.u32 %s307, 1
        %s555 = scalar_lea.sflag [#allocation4], %s554
        %s556 = sand.u32 %s307, 1
        %s557 = scalar_lea.vmem [#allocation13], %s556
        %p558 = pneg %p346
        %p559 = pneg %p343
        %s560 = sand.u32 %s333, 1
        %s561 = scalar_lea.sflag [#allocation15], %s560
        %s562 = sand.u32 %s333, 1
        %s563 = smul.addr %s562, 64
        %s564 = scalar_lea.vmem [#allocation14], %s563
        %p565 = scmp.lt.s32.totalorder %s37, 1
        %s566 = scalar_select %p565, %s37, 1
        %s567 = scalar_lea.vmem %s0, %s566
        %v568 = vld [vmem:[%s489] sm:$0xf]
        %v569 = vld [vmem:[%s489 + $0x4] sm:$0xf]
        %v570 = vld [vmem:[%s489 + $0x8] sm:$0xf]
        %v571 = vld [vmem:[%s489 + $0xc] sm:$0xf]
        %v572 = vld [vmem:[%s489 + $0x10] sm:$0xf]
        %v573 = vld [vmem:[%s489 + $0x14] sm:$0xf]
        %v574 = vld [vmem:[%s489 + $0x18] sm:$0xf]
        %v575 = vld [vmem:[%s489 + $0x1c] sm:$0xf]
        %v576 = vld [vmem:[#allocation5] sm:$0xf]
        %v577 = vld [vmem:[#allocation5 + $0x4] sm:$0xf]
        %v578 = vld [vmem:[#allocation5 + $0x8] sm:$0xf]
        %v579 = vld [vmem:[#allocation5 + $0xc] sm:$0xf]
        %v580 = vld [vmem:[#allocation5 + $0x10] sm:$0xf]
        %v581 = vld [vmem:[#allocation5 + $0x14] sm:$0xf]
        %v582 = vld [vmem:[#allocation5 + $0x18] sm:$0xf]
        %v583 = vld [vmem:[#allocation5 + $0x1c] sm:$0xf]
        %v584 = vld [vmem:[#allocation5 + $0x20] sm:$0xf]
        %v585 = vld [vmem:[#allocation5 + $0x24] sm:$0xf]
        %v586 = vld [vmem:[#allocation5 + $0x28] sm:$0xf]
        %v587 = vld [vmem:[#allocation5 + $0x2c] sm:$0xf]
        %v588 = vld [vmem:[#allocation5 + $0x30] sm:$0xf]
        %v589 = vld [vmem:[#allocation5 + $0x34] sm:$0xf]
        %v590 = vld [vmem:[#allocation5 + $0x38] sm:$0xf]
        %v591 = vld [vmem:[#allocation5 + $0x3c] sm:$0xf]
        %v592 = vld [vmem:[%s3] sm:$0x1]
        %v594 = vperm.slane %v592, 0
        %v604 = vunpack.c.l.b16 %v568
        %v605 = vunpack.c.l.b16 %v569
        %v606 = vunpack.c.l.b16 %v570
        %v607 = vunpack.c.l.b16 %v571
        %v608 = vunpack.c.l.b16 %v572
        %v609 = vunpack.c.l.b16 %v573
        %v610 = vunpack.c.l.b16 %v574
        %v611 = vunpack.c.l.b16 %v575
        %v612 = vpack.c.b16 %v605, %v604
        %v613 = vpack.c.b16 %v607, %v606
        %v614 = vpack.c.b16 %v609, %v608
        %v615 = vpack.c.b16 %v611, %v610
        %v636 = vunpack.c.l.b16 %v576
        %v637 = vunpack.c.l.b16 %v577
        %v638 = vunpack.c.l.b16 %v578
        %v639 = vunpack.c.l.b16 %v579
        %v640 = vunpack.c.l.b16 %v580
        %v641 = vunpack.c.l.b16 %v581
        %v642 = vunpack.c.l.b16 %v582
        %v643 = vunpack.c.l.b16 %v583
        %v644 = vunpack.c.l.b16 %v584
        %v645 = vunpack.c.l.b16 %v585
        %v646 = vunpack.c.l.b16 %v586
        %v647 = vunpack.c.l.b16 %v587
        %v648 = vunpack.c.l.b16 %v588
        %v649 = vunpack.c.l.b16 %v589
        %v650 = vunpack.c.l.b16 %v590
        %v651 = vunpack.c.l.b16 %v591
        %v652 = vpack.c.b16 %v637, %v636
        %v653 = vpack.c.b16 %v639, %v638
        %v654 = vpack.c.b16 %v641, %v640
        %v655 = vpack.c.b16 %v643, %v642
        %v656 = vpack.c.b16 %v645, %v644
        %v657 = vpack.c.b16 %v647, %v646
        %v658 = vpack.c.b16 %v649, %v648
        %v659 = vpack.c.b16 %v651, %v650
        %668 = vmatpush.bf16.msra.mxu0 %v659
        %669 = vmatpush.bf16.msra.mxu0 %v658
        %670 = vmatpush.bf16.msra.mxu0 %v657
        %671 = vmatpush.bf16.msra.mxu0 %v656
        %672 = vmatpush.bf16.msra.mxu0 %v655
        %673 = vmatpush.bf16.msra.mxu0 %v654
        %674 = vmatpush.bf16.msra.mxu0 %v653
        %675 = vmatpush.bf16.msra.mxu0 %v652
        %676 = vmatmul.bf16.gmra.mxu0 %v612
        %v677 = vpop.f32.mrf.mxu0
        %v678 = vadd.f32 %v594, %v677
        %v679 = vpop.f32.mrf.mxu0
        %v680 = vadd.f32 %v594, %v679
        %681 = vmatmul.bf16.gmra.mxu0 %v613
        %v682 = vpop.f32.mrf.mxu0
        %v683 = vadd.f32 %v594, %v682
        %v684 = vpop.f32.mrf.mxu0
        %v685 = vadd.f32 %v594, %v684
        %686 = vmatmul.bf16.gmra.mxu0 %v614
        %v687 = vpop.f32.mrf.mxu0
        %v688 = vadd.f32 %v594, %v687
        %v689 = vpop.f32.mrf.mxu0
        %v690 = vadd.f32 %v594, %v689
        %691 = vmatmul.bf16.gmra.mxu0 %v615
        %v692 = vpop.f32.mrf.mxu0
        %v693 = vadd.f32 %v594, %v692
        %v694 = vpop.f32.mrf.mxu0
        %v695 = vadd.f32 %v594, %v694
        %696 = vdwg.mxu0
        %v697 = vmul.f32 %v678, 0.5
        %v698 = vmul.f32 %v680, 0.5
        %v699 = vmul.f32 %v683, 0.5
        %v700 = vmul.f32 %v685, 0.5
        %v701 = vmul.f32 %v688, 0.5
        %v702 = vmul.f32 %v690, 0.5
        %v703 = vmul.f32 %v693, 0.5
        %v704 = vmul.f32 %v695, 0.5
        %v705 = vmul.f32 %v678, 0.70710677
        %v706 = vmul.f32 %v680, 0.70710677
        %v707 = vmul.f32 %v683, 0.70710677
        %v708 = vmul.f32 %v685, 0.70710677
        %v709 = vmul.f32 %v688, 0.70710677
        %v710 = vmul.f32 %v690, 0.70710677
        %v711 = vmul.f32 %v693, 0.70710677
        %v712 = vmul.f32 %v695, 0.70710677
        %v713 = vmul.f32 %v705, %v705
        %v714 = vmin.f32 16.0, %v713
        %v715 = vmul.f32 %v714, 2.1237322e-06
        %v716 = vadd.f32 %v715, 0.00028619796
        %v717 = vmul.f32 %v714, %v716
        %v718 = vadd.f32 %v717, 0.0036580483
        %v719 = vmul.f32 %v714, %v718
        %v720 = vadd.f32 %v719, 0.05243302
        %v721 = vmul.f32 %v714, %v720
        %v722 = vadd.f32 %v721, 0.18741608
        %v723 = vmul.f32 %v714, %v722
        %v724 = vadd.f32 %v723, 1.1283791
        %v725 = vmul.f32 %v705, %v724
        %v726 = vmul.f32 %v714, 3.8918573e-05
        %v727 = vadd.f32 %v726, 0.001143296
        %v728 = vmul.f32 %v714, %v727
        %v729 = vadd.f32 %v728, 0.014752088
        %v730 = vmul.f32 %v714, %v729
        %v731 = vadd.f32 %v730, 0.112945676
        %v732 = vmul.f32 %v714, %v731
        %v733 = vadd.f32 %v732, 0.4994258
        %v734 = vmul.f32 %v714, %v733
        %v735 = vadd.f32 %v734, 1.0
        %v736 = vrcp.pop %v735
        %v737 = vmul.f32 %v735, %v736
        %v738 = vsub.f32 1.0, %v737
        %v739 = vmul.f32 %v736, %v738
        %v740 = vadd.f32 %v736, %v739
        %vm741 = vweird.f32 %v735
        %vm742 = vweird.f32 %v736
        %vm743 = vmor %vm741, %vm742
        %v744 = vsel %vm743, %v736, %v740
        %v745 = vand.u32 2147483647, %v735
        %vm746 = vcmp.eq.f32.partialorder %v745, 8.507059e+37
        %v747 = vand.u32 %v735, 2147483648
        %v748 = vor.u32 1.1754944e-38, %v747
        %v749 = vsel %vm746, %v748, %v744
        %v750 = vmul.f32 %v725, %v749
        %v751 = vmin.f32 %v750, 1.0
        %v752 = vmax.f32 %v751, -1.0
        %v753 = vmul.f32 %v706, %v706
        %v754 = vmin.f32 16.0, %v753
        %v755 = vmul.f32 %v754, 2.1237322e-06
        %v756 = vadd.f32 %v755, 0.00028619796
        %v757 = vmul.f32 %v754, %v756
        %v758 = vadd.f32 %v757, 0.0036580483
        %v759 = vmul.f32 %v754, %v758
        %v760 = vadd.f32 %v759, 0.05243302
        %v761 = vmul.f32 %v754, %v760
        %v762 = vadd.f32 %v761, 0.18741608
        %v763 = vmul.f32 %v754, %v762
        %v764 = vadd.f32 %v763, 1.1283791
        %v765 = vmul.f32 %v706, %v764
        %v766 = vmul.f32 %v754, 3.8918573e-05
        %v767 = vadd.f32 %v766, 0.001143296
        %v768 = vmul.f32 %v754, %v767
        %v769 = vadd.f32 %v768, 0.014752088
        %v770 = vmul.f32 %v754, %v769
        %v771 = vadd.f32 %v770, 0.112945676
        %v772 = vmul.f32 %v754, %v771
        %v773 = vadd.f32 %v772, 0.4994258
        %v774 = vmul.f32 %v754, %v773
        %v775 = vadd.f32 %v774, 1.0
        %v776 = vrcp.pop %v775
        %v777 = vmul.f32 %v775, %v776
        %v778 = vsub.f32 1.0, %v777
        %v779 = vmul.f32 %v776, %v778
        %v780 = vadd.f32 %v776, %v779
        %vm781 = vweird.f32 %v775
        %vm782 = vweird.f32 %v776
        %vm783 = vmor %vm781, %vm782
        %v784 = vsel %vm783, %v776, %v780
        %v785 = vand.u32 2147483647, %v775
        %vm786 = vcmp.eq.f32.partialorder %v785, 8.507059e+37
        %v787 = vand.u32 %v775, 2147483648
        %v788 = vor.u32 1.1754944e-38, %v787
        %v789 = vsel %vm786, %v788, %v784
        %v790 = vmul.f32 %v765, %v789
        %v791 = vmin.f32 %v790, 1.0
        %v792 = vmax.f32 %v791, -1.0
        %v793 = vmul.f32 %v707, %v707
        %v794 = vmin.f32 16.0, %v793
        %v795 = vmul.f32 %v794, 2.1237322e-06
        %v796 = vadd.f32 %v795, 0.00028619796
        %v797 = vmul.f32 %v794, %v796
        %v798 = vadd.f32 %v797, 0.0036580483
        %v799 = vmul.f32 %v794, %v798
        %v800 = vadd.f32 %v799, 0.05243302
        %v801 = vmul.f32 %v794, %v800
        %v802 = vadd.f32 %v801, 0.18741608
        %v803 = vmul.f32 %v794, %v802
        %v804 = vadd.f32 %v803, 1.1283791
        %v805 = vmul.f32 %v707, %v804
        %v806 = vmul.f32 %v794, 3.8918573e-05
        %v807 = vadd.f32 %v806, 0.001143296
        %v808 = vmul.f32 %v794, %v807
        %v809 = vadd.f32 %v808, 0.014752088
        %v810 = vmul.f32 %v794, %v809
        %v811 = vadd.f32 %v810, 0.112945676
        %v812 = vmul.f32 %v794, %v811
        %v813 = vadd.f32 %v812, 0.4994258
        %v814 = vmul.f32 %v794, %v813
        %v815 = vadd.f32 %v814, 1.0
        %v816 = vrcp.pop %v815
        %v817 = vmul.f32 %v815, %v816
        %v818 = vsub.f32 1.0, %v817
        %v819 = vmul.f32 %v816, %v818
        %v820 = vadd.f32 %v816, %v819
        %vm821 = vweird.f32 %v815
        %vm822 = vweird.f32 %v816
        %vm823 = vmor %vm821, %vm822
        %v824 = vsel %vm823, %v816, %v820
        %v825 = vand.u32 2147483647, %v815
        %vm826 = vcmp.eq.f32.partialorder %v825, 8.507059e+37
        %v827 = vand.u32 %v815, 2147483648
        %v828 = vor.u32 1.1754944e-38, %v827
        %v829 = vsel %vm826, %v828, %v824
        %v830 = vmul.f32 %v805, %v829
        %v831 = vmin.f32 %v830, 1.0
        %v832 = vmax.f32 %v831, -1.0
        %v833 = vmul.f32 %v708, %v708
        %v834 = vmin.f32 16.0, %v833
        %v835 = vmul.f32 %v834, 2.1237322e-06
        %v836 = vadd.f32 %v835, 0.00028619796
        %v837 = vmul.f32 %v834, %v836
        %v838 = vadd.f32 %v837, 0.0036580483
        %v839 = vmul.f32 %v834, %v838
        %v840 = vadd.f32 %v839, 0.05243302
        %v841 = vmul.f32 %v834, %v840
        %v842 = vadd.f32 %v841, 0.18741608
        %v843 = vmul.f32 %v834, %v842
        %v844 = vadd.f32 %v843, 1.1283791
        %v845 = vmul.f32 %v708, %v844
        %v846 = vmul.f32 %v834, 3.8918573e-05
        %v847 = vadd.f32 %v846, 0.001143296
        %v848 = vmul.f32 %v834, %v847
        %v849 = vadd.f32 %v848, 0.014752088
        %v850 = vmul.f32 %v834, %v849
        %v851 = vadd.f32 %v850, 0.112945676
        %v852 = vmul.f32 %v834, %v851
        %v853 = vadd.f32 %v852, 0.4994258
        %v854 = vmul.f32 %v834, %v853
        %v855 = vadd.f32 %v854, 1.0
        %v856 = vrcp.pop %v855
        %v857 = vmul.f32 %v855, %v856
        %v858 = vsub.f32 1.0, %v857
        %v859 = vmul.f32 %v856, %v858
        %v860 = vadd.f32 %v856, %v859
        %vm861 = vweird.f32 %v855
        %vm862 = vweird.f32 %v856
        %vm863 = vmor %vm861, %vm862
        %v864 = vsel %vm863, %v856, %v860
        %v865 = vand.u32 2147483647, %v855
        %vm866 = vcmp.eq.f32.partialorder %v865, 8.507059e+37
        %v867 = vand.u32 %v855, 2147483648
        %v868 = vor.u32 1.1754944e-38, %v867
        %v869 = vsel %vm866, %v868, %v864
        %v870 = vmul.f32 %v845, %v869
        %v871 = vmin.f32 %v870, 1.0
        %v872 = vmax.f32 %v871, -1.0
        %v873 = vmul.f32 %v709, %v709
        %v874 = vmin.f32 16.0, %v873
        %v875 = vmul.f32 %v874, 2.1237322e-06
        %v876 = vadd.f32 %v875, 0.00028619796
        %v877 = vmul.f32 %v874, %v876
        %v878 = vadd.f32 %v877, 0.0036580483
        %v879 = vmul.f32 %v874, %v878
        %v880 = vadd.f32 %v879, 0.05243302
        %v881 = vmul.f32 %v874, %v880
        %v882 = vadd.f32 %v881, 0.18741608
        %v883 = vmul.f32 %v874, %v882
        %v884 = vadd.f32 %v883, 1.1283791
        %v885 = vmul.f32 %v709, %v884
        %v886 = vmul.f32 %v874, 3.8918573e-05
        %v887 = vadd.f32 %v886, 0.001143296
        %v888 = vmul.f32 %v874, %v887
        %v889 = vadd.f32 %v888, 0.014752088
        %v890 = vmul.f32 %v874, %v889
        %v891 = vadd.f32 %v890, 0.112945676
        %v892 = vmul.f32 %v874, %v891
        %v893 = vadd.f32 %v892, 0.4994258
        %v894 = vmul.f32 %v874, %v893
        %v895 = vadd.f32 %v894, 1.0
        %v896 = vrcp.pop %v895
        %v897 = vmul.f32 %v895, %v896
        %v898 = vsub.f32 1.0, %v897
        %v899 = vmul.f32 %v896, %v898
        %v900 = vadd.f32 %v896, %v899
        %vm901 = vweird.f32 %v895
        %vm902 = vweird.f32 %v896
        %vm903 = vmor %vm901, %vm902
        %v904 = vsel %vm903, %v896, %v900
        %v905 = vand.u32 2147483647, %v895
        %vm906 = vcmp.eq.f32.partialorder %v905, 8.507059e+37
        %v907 = vand.u32 %v895, 2147483648
        %v908 = vor.u32 1.1754944e-38, %v907
        %v909 = vsel %vm906, %v908, %v904
        %v910 = vmul.f32 %v885, %v909
        %v911 = vmin.f32 %v910, 1.0
        %v912 = vmax.f32 %v911, -1.0
        %v913 = vmul.f32 %v710, %v710
        %v914 = vmin.f32 16.0, %v913
        %v915 = vmul.f32 %v914, 2.1237322e-06
        %v916 = vadd.f32 %v915, 0.00028619796
        %v917 = vmul.f32 %v914, %v916
        %v918 = vadd.f32 %v917, 0.0036580483
        %v919 = vmul.f32 %v914, %v918
        %v920 = vadd.f32 %v919, 0.05243302
        %v921 = vmul.f32 %v914, %v920
        %v922 = vadd.f32 %v921, 0.18741608
        %v923 = vmul.f32 %v914, %v922
        %v924 = vadd.f32 %v923, 1.1283791
        %v925 = vmul.f32 %v710, %v924
        %v926 = vmul.f32 %v914, 3.8918573e-05
        %v927 = vadd.f32 %v926, 0.001143296
        %v928 = vmul.f32 %v914, %v927
        %v929 = vadd.f32 %v928, 0.014752088
        %v930 = vmul.f32 %v914, %v929
        %v931 = vadd.f32 %v930, 0.112945676
        %v932 = vmul.f32 %v914, %v931
        %v933 = vadd.f32 %v932, 0.4994258
        %v934 = vmul.f32 %v914, %v933
        %v935 = vadd.f32 %v934, 1.0
        %v936 = vrcp.pop %v935
        %v937 = vmul.f32 %v935, %v936
        %v938 = vsub.f32 1.0, %v937
        %v939 = vmul.f32 %v936, %v938
        %v940 = vadd.f32 %v936, %v939
        %vm941 = vweird.f32 %v935
        %vm942 = vweird.f32 %v936
        %vm943 = vmor %vm941, %vm942
        %v944 = vsel %vm943, %v936, %v940
        %v945 = vand.u32 2147483647, %v935
        %vm946 = vcmp.eq.f32.partialorder %v945, 8.507059e+37
        %v947 = vand.u32 %v935, 2147483648
        %v948 = vor.u32 1.1754944e-38, %v947
        %v949 = vsel %vm946, %v948, %v944
        %v950 = vmul.f32 %v925, %v949
        %v951 = vmin.f32 %v950, 1.0
        %v952 = vmax.f32 %v951, -1.0
        %v953 = vmul.f32 %v711, %v711
        %v954 = vmin.f32 16.0, %v953
        %v955 = vmul.f32 %v954, 2.1237322e-06
        %v956 = vadd.f32 %v955, 0.00028619796
        %v957 = vmul.f32 %v954, %v956
        %v958 = vadd.f32 %v957, 0.0036580483
        %v959 = vmul.f32 %v954, %v958
        %v960 = vadd.f32 %v959, 0.05243302
        %v961 = vmul.f32 %v954, %v960
        %v962 = vadd.f32 %v961, 0.18741608
        %v963 = vmul.f32 %v954, %v962
        %v964 = vadd.f32 %v963, 1.1283791
        %v965 = vmul.f32 %v711, %v964
        %v966 = vmul.f32 %v954, 3.8918573e-05
        %v967 = vadd.f32 %v966, 0.001143296
        %v968 = vmul.f32 %v954, %v967
        %v969 = vadd.f32 %v968, 0.014752088
        %v970 = vmul.f32 %v954, %v969
        %v971 = vadd.f32 %v970, 0.112945676
        %v972 = vmul.f32 %v954, %v971
        %v973 = vadd.f32 %v972, 0.4994258
        %v974 = vmul.f32 %v954, %v973
        %v975 = vadd.f32 %v974, 1.0
        %v976 = vrcp.pop %v975
        %v977 = vmul.f32 %v975, %v976
        %v978 = vsub.f32 1.0, %v977
        %v979 = vmul.f32 %v976, %v978
        %v980 = vadd.f32 %v976, %v979
        %vm981 = vweird.f32 %v975
        %vm982 = vweird.f32 %v976
        %vm983 = vmor %vm981, %vm982
        %v984 = vsel %vm983, %v976, %v980
        %v985 = vand.u32 2147483647, %v975
        %vm986 = vcmp.eq.f32.partialorder %v985, 8.507059e+37
        %v987 = vand.u32 %v975, 2147483648
        %v988 = vor.u32 1.1754944e-38, %v987
        %v989 = vsel %vm986, %v988, %v984
        %v990 = vmul.f32 %v965, %v989
        %v991 = vmin.f32 %v990, 1.0
        %v992 = vmax.f32 %v991, -1.0
        %v993 = vmul.f32 %v712, %v712
        %v994 = vmin.f32 16.0, %v993
        %v995 = vmul.f32 %v994, 2.1237322e-06
        %v996 = vadd.f32 %v995, 0.00028619796
        %v997 = vmul.f32 %v994, %v996
        %v998 = vadd.f32 %v997, 0.0036580483
        %v999 = vmul.f32 %v994, %v998
        %v1000 = vadd.f32 %v999, 0.05243302
        %v1001 = vmul.f32 %v994, %v1000
        %v1002 = vadd.f32 %v1001, 0.18741608
        %v1003 = vmul.f32 %v994, %v1002
        %v1004 = vadd.f32 %v1003, 1.1283791
        %v1005 = vmul.f32 %v712, %v1004
        %v1006 = vmul.f32 %v994, 3.8918573e-05
        %v1007 = vadd.f32 %v1006, 0.001143296
        %v1008 = vmul.f32 %v994, %v1007
        %v1009 = vadd.f32 %v1008, 0.014752088
        %v1010 = vmul.f32 %v994, %v1009
        %v1011 = vadd.f32 %v1010, 0.112945676
        %v1012 = vmul.f32 %v994, %v1011
        %v1013 = vadd.f32 %v1012, 0.4994258
        %v1014 = vmul.f32 %v994, %v1013
        %v1015 = vadd.f32 %v1014, 1.0
        %v1016 = vrcp.pop %v1015
        %v1017 = vmul.f32 %v1015, %v1016
        %v1018 = vsub.f32 1.0, %v1017
        %v1019 = vmul.f32 %v1016, %v1018
        %v1020 = vadd.f32 %v1016, %v1019
        %vm1021 = vweird.f32 %v1015
        %vm1022 = vweird.f32 %v1016
        %vm1023 = vmor %vm1021, %vm1022
        %v1024 = vsel %vm1023, %v1016, %v1020
        %v1025 = vand.u32 2147483647, %v1015
        %vm1026 = vcmp.eq.f32.partialorder %v1025, 8.507059e+37
        %v1027 = vand.u32 %v1015, 2147483648
        %v1028 = vor.u32 1.1754944e-38, %v1027
        %v1029 = vsel %vm1026, %v1028, %v1024
        %v1030 = vmul.f32 %v1005, %v1029
        %v1031 = vmin.f32 %v1030, 1.0
        %v1032 = vmax.f32 %v1031, -1.0
        %v1033 = vadd.f32 %v752, 1.0
        %v1034 = vadd.f32 %v792, 1.0
        %v1035 = vadd.f32 %v832, 1.0
        %v1036 = vadd.f32 %v872, 1.0
        %v1037 = vadd.f32 %v912, 1.0
        %v1038 = vadd.f32 %v952, 1.0
        %v1039 = vadd.f32 %v992, 1.0
        %v1040 = vadd.f32 %v1032, 1.0
        %v1041 = vmul.f32 %v697, %v1033
        %v1042 = vmul.f32 %v698, %v1034
        %v1043 = vmul.f32 %v699, %v1035
        %v1044 = vmul.f32 %v700, %v1036
        %v1045 = vmul.f32 %v701, %v1037
        %v1046 = vmul.f32 %v702, %v1038
        %v1047 = vmul.f32 %v703, %v1039
        %v1048 = vmul.f32 %v704, %v1040
        %v1049 = vld [vmem:[#allocation7] sm:$0xf]
        %v1050 = vld [vmem:[#allocation7 + $0x4] sm:$0x1]
        %v1051 = vunpack.c.l.bf16 %v1049
        %v1052 = vunpack.c.l.bf16 %v1050
        %v1061 = vrot.slane 0.0, 7
        %v1062 = vrot.slane %v1041, 7
        %v1063 = vrot.slane %v1042, 7
        %v1064 = vrot.slane %v1043, 7
        %v1065 = vrot.slane %v1044, 7
        %v1066 = vrot.slane %v1045, 7
        %v1067 = vrot.slane %v1046, 7
        %v1068 = vrot.slane %v1047, 7
        %vm1077 = vcmask 1040384
        %v1078 = vsel %vm1077, 0.0, %v1061
        %v1079 = vsel %vm1077, 0.0, %v1062
        %v1080 = vsel %vm1077, 0.0, %v1063
        %v1081 = vsel %vm1077, 0.0, %v1064
        %v1082 = vsel %vm1077, 0.0, %v1065
        %v1083 = vsel %vm1077, 0.0, %v1066
        %v1084 = vsel %vm1077, 0.0, %v1067
        %v1085 = vsel %vm1077, 0.0, %v1068
        %v1086 = vperm.slane %v1051, 0
        %v1087 = vmul.f32 %v1078, %v1086
        %v1088 = vmul.f32 %v1079, %v1086
        %v1089 = vmul.f32 %v1080, %v1086
        %v1090 = vmul.f32 %v1081, %v1086
        %v1091 = vmul.f32 %v1082, %v1086
        %v1092 = vmul.f32 %v1083, %v1086
        %v1093 = vmul.f32 %v1084, %v1086
        %v1094 = vmul.f32 %v1085, %v1086
        %v1095 = vadd.f32 %v1087, 0.0
        %v1096 = vadd.f32 %v1088, 0.0
        %v1097 = vadd.f32 %v1089, 0.0
        %v1098 = vadd.f32 %v1090, 0.0
        %v1099 = vadd.f32 %v1091, 0.0
        %v1100 = vadd.f32 %v1092, 0.0
        %v1101 = vadd.f32 %v1093, 0.0
        %v1102 = vadd.f32 %v1094, 0.0
        %v1103 = vperm.slane %v1051, 1
        %v1104 = vmul.f32 %v1103, 0.0
        %v1105 = vmul.f32 %v1041, %v1103
        %v1106 = vmul.f32 %v1042, %v1103
        %v1107 = vmul.f32 %v1043, %v1103
        %v1108 = vmul.f32 %v1044, %v1103
        %v1109 = vmul.f32 %v1045, %v1103
        %v1110 = vmul.f32 %v1046, %v1103
        %v1111 = vmul.f32 %v1047, %v1103
        %v1112 = vadd.f32 %v1095, %v1104
        %v1113 = vadd.f32 %v1096, %v1105
        %v1114 = vadd.f32 %v1097, %v1106
        %v1115 = vadd.f32 %v1098, %v1107
        %v1116 = vadd.f32 %v1099, %v1108
        %v1117 = vadd.f32 %v1100, %v1109
        %v1118 = vadd.f32 %v1101, %v1110
        %v1119 = vadd.f32 %v1102, %v1111
        %v1120 = vrot.slane 0.0, 1
        %v1121 = vrot.slane %v1041, 1
        %v1122 = vrot.slane %v1042, 1
        %v1123 = vrot.slane %v1043, 1
        %v1124 = vrot.slane %v1044, 1
        %v1125 = vrot.slane %v1045, 1
        %v1126 = vrot.slane %v1046, 1
        %v1127 = vrot.slane %v1047, 1
        %vm1136 = vcmask 1046528
        %v1137 = vsel %vm1136, %v1120, 0.0
        %v1138 = vsel %vm1136, %v1121, 0.0
        %v1139 = vsel %vm1136, %v1122, 0.0
        %v1140 = vsel %vm1136, %v1123, 0.0
        %v1141 = vsel %vm1136, %v1124, 0.0
        %v1142 = vsel %vm1136, %v1125, 0.0
        %v1143 = vsel %vm1136, %v1126, 0.0
        %v1144 = vsel %vm1136, %v1127, 0.0
        %v1145 = vperm.slane %v1051, 2
        %v1146 = vmul.f32 %v1137, %v1145
        %v1147 = vmul.f32 %v1138, %v1145
        %v1148 = vmul.f32 %v1139, %v1145
        %v1149 = vmul.f32 %v1140, %v1145
        %v1150 = vmul.f32 %v1141, %v1145
        %v1151 = vmul.f32 %v1142, %v1145
        %v1152 = vmul.f32 %v1143, %v1145
        %v1153 = vmul.f32 %v1144, %v1145
        %v1154 = vadd.f32 %v1112, %v1146
        %v1155 = vadd.f32 %v1113, %v1147
        %v1156 = vadd.f32 %v1114, %v1148
        %v1157 = vadd.f32 %v1115, %v1149
        %v1158 = vadd.f32 %v1116, %v1150
        %v1159 = vadd.f32 %v1117, %v1151
        %v1160 = vadd.f32 %v1118, %v1152
        %v1161 = vadd.f32 %v1119, %v1153
        %v1163 = vrot.slane %v1048, 7
        %v1165 = vsel %vm1077, 0.0, %v1163
        %v1166 = vperm.slane %v1051, 3
        %v1167 = vmul.f32 %v1079, %v1166
        %v1168 = vmul.f32 %v1080, %v1166
        %v1169 = vmul.f32 %v1081, %v1166
        %v1170 = vmul.f32 %v1082, %v1166
        %v1171 = vmul.f32 %v1083, %v1166
        %v1172 = vmul.f32 %v1084, %v1166
        %v1173 = vmul.f32 %v1085, %v1166
        %v1174 = vmul.f32 %v1165, %v1166
        %v1175 = vadd.f32 %v1154, %v1167
        %v1176 = vadd.f32 %v1155, %v1168
        %v1177 = vadd.f32 %v1156, %v1169
        %v1178 = vadd.f32 %v1157, %v1170
        %v1179 = vadd.f32 %v1158, %v1171
        %v1180 = vadd.f32 %v1159, %v1172
        %v1181 = vadd.f32 %v1160, %v1173
        %v1182 = vadd.f32 %v1161, %v1174
        %v1183 = vperm.slane %v1051, 4
        %v1184 = vmul.f32 %v1041, %v1183
        %v1185 = vmul.f32 %v1042, %v1183
        %v1186 = vmul.f32 %v1043, %v1183
        %v1187 = vmul.f32 %v1044, %v1183
        %v1188 = vmul.f32 %v1045, %v1183
        %v1189 = vmul.f32 %v1046, %v1183
        %v1190 = vmul.f32 %v1047, %v1183
        %v1191 = vmul.f32 %v1048, %v1183
        %v1192 = vadd.f32 %v1175, %v1184
        %v1193 = vadd.f32 %v1176, %v1185
        %v1194 = vadd.f32 %v1177, %v1186
        %v1195 = vadd.f32 %v1178, %v1187
        %v1196 = vadd.f32 %v1179, %v1188
        %v1197 = vadd.f32 %v1180, %v1189
        %v1198 = vadd.f32 %v1181, %v1190
        %v1199 = vadd.f32 %v1182, %v1191
        %v1200 = vrot.slane %v1048, 1
        %v1202 = vsel %vm1136, %v1200, 0.0
        %v1203 = vperm.slane %v1051, 5
        %v1204 = vmul.f32 %v1138, %v1203
        %v1205 = vmul.f32 %v1139, %v1203
        %v1206 = vmul.f32 %v1140, %v1203
        %v1207 = vmul.f32 %v1141, %v1203
        %v1208 = vmul.f32 %v1142, %v1203
        %v1209 = vmul.f32 %v1143, %v1203
        %v1210 = vmul.f32 %v1144, %v1203
        %v1211 = vmul.f32 %v1202, %v1203
        %v1212 = vadd.f32 %v1192, %v1204
        %v1213 = vadd.f32 %v1193, %v1205
        %v1214 = vadd.f32 %v1194, %v1206
        %v1215 = vadd.f32 %v1195, %v1207
        %v1216 = vadd.f32 %v1196, %v1208
        %v1217 = vadd.f32 %v1197, %v1209
        %v1218 = vadd.f32 %v1198, %v1210
        %v1219 = vadd.f32 %v1199, %v1211
        %v1220 = vperm.slane %v1051, 6
        %v1221 = vmul.f32 %v1080, %v1220
        %v1222 = vmul.f32 %v1081, %v1220
        %v1223 = vmul.f32 %v1082, %v1220
        %v1224 = vmul.f32 %v1083, %v1220
        %v1225 = vmul.f32 %v1084, %v1220
        %v1226 = vmul.f32 %v1085, %v1220
        %v1227 = vmul.f32 %v1165, %v1220
        %v1228 = vmul.f32 %v1078, %v1220
        %v1229 = vadd.f32 %v1212, %v1221
        %v1230 = vadd.f32 %v1213, %v1222
        %v1231 = vadd.f32 %v1214, %v1223
        %v1232 = vadd.f32 %v1215, %v1224
        %v1233 = vadd.f32 %v1216, %v1225
        %v1234 = vadd.f32 %v1217, %v1226
        %v1235 = vadd.f32 %v1218, %v1227
        %v1236 = vadd.f32 %v1219, %v1228
        %v1237 = vperm.slane %v1051, 7
        %v1238 = vmul.f32 %v1042, %v1237
        %v1239 = vmul.f32 %v1043, %v1237
        %v1240 = vmul.f32 %v1044, %v1237
        %v1241 = vmul.f32 %v1045, %v1237
        %v1242 = vmul.f32 %v1046, %v1237
        %v1243 = vmul.f32 %v1047, %v1237
        %v1244 = vmul.f32 %v1048, %v1237
        %v1245 = vmul.f32 %v1237, 0.0
        %v1246 = vadd.f32 %v1229, %v1238
        %v1247 = vadd.f32 %v1230, %v1239
        %v1248 = vadd.f32 %v1231, %v1240
        %v1249 = vadd.f32 %v1232, %v1241
        %v1250 = vadd.f32 %v1233, %v1242
        %v1251 = vadd.f32 %v1234, %v1243
        %v1252 = vadd.f32 %v1235, %v1244
        %v1253 = vadd.f32 %v1236, %v1245
        %v1254 = vperm.slane %v1052, 0
        %v1255 = vmul.f32 %v1139, %v1254
        %v1256 = vmul.f32 %v1140, %v1254
        %v1257 = vmul.f32 %v1141, %v1254
        %v1258 = vmul.f32 %v1142, %v1254
        %v1259 = vmul.f32 %v1143, %v1254
        %v1260 = vmul.f32 %v1144, %v1254
        %v1261 = vmul.f32 %v1202, %v1254
        %v1262 = vmul.f32 %v1137, %v1254
        %v1263 = vadd.f32 %v1246, %v1255
        %v1264 = vadd.f32 %v1247, %v1256
        %v1265 = vadd.f32 %v1248, %v1257
        %v1266 = vadd.f32 %v1249, %v1258
        %v1267 = vadd.f32 %v1250, %v1259
        %v1268 = vadd.f32 %v1251, %v1260
        %v1269 = vadd.f32 %v1252, %v1261
        %v1270 = vadd.f32 %v1253, %v1262
        %v1271 = vld [vmem:[%s5] sm:$0x1]
        %v1273 = vperm.slane %v1271, 0
        %v1275 = vadd.f32 %v1263, %v1273
        %v1276 = vadd.f32 %v1264, %v1273
        %v1277 = vadd.f32 %v1265, %v1273
        %v1278 = vadd.f32 %v1266, %v1273
        %v1279 = vadd.f32 %v1267, %v1273
        %v1280 = vadd.f32 %v1268, %v1273
        %v1281 = vadd.f32 %v1269, %v1273
        %v1282 = vadd.f32 %v1270, %v1273
        %v1283 = vmul.f32 %v1275, 0.5
        %v1284 = vmul.f32 %v1276, 0.5
        %v1285 = vmul.f32 %v1277, 0.5
        %v1286 = vmul.f32 %v1278, 0.5
        %v1287 = vmul.f32 %v1279, 0.5
        %v1288 = vmul.f32 %v1280, 0.5
        %v1289 = vmul.f32 %v1281, 0.5
        %v1290 = vmul.f32 %v1282, 0.5
        %v1291 = vmul.f32 %v1275, 0.70710677
        %v1292 = vmul.f32 %v1276, 0.70710677
        %v1293 = vmul.f32 %v1277, 0.70710677
        %v1294 = vmul.f32 %v1278, 0.70710677
        %v1295 = vmul.f32 %v1279, 0.70710677
        %v1296 = vmul.f32 %v1280, 0.70710677
        %v1297 = vmul.f32 %v1281, 0.70710677
        %v1298 = vmul.f32 %v1282, 0.70710677
        %v1299 = vmul.f32 %v1291, %v1291
        %v1300 = vmin.f32 16.0, %v1299
        %v1301 = vmul.f32 %v1300, 2.1237322e-06
        %v1302 = vadd.f32 %v1301, 0.00028619796
        %v1303 = vmul.f32 %v1300, %v1302
        %v1304 = vadd.f32 %v1303, 0.0036580483
        %v1305 = vmul.f32 %v1300, %v1304
        %v1306 = vadd.f32 %v1305, 0.05243302
        %v1307 = vmul.f32 %v1300, %v1306
        %v1308 = vadd.f32 %v1307, 0.18741608
        %v1309 = vmul.f32 %v1300, %v1308
        %v1310 = vadd.f32 %v1309, 1.1283791
        %v1311 = vmul.f32 %v1291, %v1310
        %v1312 = vmul.f32 %v1300, 3.8918573e-05
        %v1313 = vadd.f32 %v1312, 0.001143296
        %v1314 = vmul.f32 %v1300, %v1313
        %v1315 = vadd.f32 %v1314, 0.014752088
        %v1316 = vmul.f32 %v1300, %v1315
        %v1317 = vadd.f32 %v1316, 0.112945676
        %v1318 = vmul.f32 %v1300, %v1317
        %v1319 = vadd.f32 %v1318, 0.4994258
        %v1320 = vmul.f32 %v1300, %v1319
        %v1321 = vadd.f32 %v1320, 1.0
        %v1322 = vrcp.pop %v1321
        %v1323 = vmul.f32 %v1321, %v1322
        %v1324 = vsub.f32 1.0, %v1323
        %v1325 = vmul.f32 %v1322, %v1324
        %v1326 = vadd.f32 %v1322, %v1325
        %vm1327 = vweird.f32 %v1321
        %vm1328 = vweird.f32 %v1322
        %vm1329 = vmor %vm1327, %vm1328
        %v1330 = vsel %vm1329, %v1322, %v1326
        %v1331 = vand.u32 2147483647, %v1321
        %vm1332 = vcmp.eq.f32.partialorder %v1331, 8.507059e+37
        %v1333 = vand.u32 %v1321, 2147483648
        %v1334 = vor.u32 1.1754944e-38, %v1333
        %v1335 = vsel %vm1332, %v1334, %v1330
        %v1336 = vmul.f32 %v1311, %v1335
        %v1337 = vmin.f32 %v1336, 1.0
        %v1338 = vmax.f32 %v1337, -1.0
        %v1339 = vmul.f32 %v1292, %v1292
        %v1340 = vmin.f32 16.0, %v1339
        %v1341 = vmul.f32 %v1340, 2.1237322e-06
        %v1342 = vadd.f32 %v1341, 0.00028619796
        %v1343 = vmul.f32 %v1340, %v1342
        %v1344 = vadd.f32 %v1343, 0.0036580483
        %v1345 = vmul.f32 %v1340, %v1344
        %v1346 = vadd.f32 %v1345, 0.05243302
        %v1347 = vmul.f32 %v1340, %v1346
        %v1348 = vadd.f32 %v1347, 0.18741608
        %v1349 = vmul.f32 %v1340, %v1348
        %v1350 = vadd.f32 %v1349, 1.1283791
        %v1351 = vmul.f32 %v1292, %v1350
        %v1352 = vmul.f32 %v1340, 3.8918573e-05
        %v1353 = vadd.f32 %v1352, 0.001143296
        %v1354 = vmul.f32 %v1340, %v1353
        %v1355 = vadd.f32 %v1354, 0.014752088
        %v1356 = vmul.f32 %v1340, %v1355
        %v1357 = vadd.f32 %v1356, 0.112945676
        %v1358 = vmul.f32 %v1340, %v1357
        %v1359 = vadd.f32 %v1358, 0.4994258
        %v1360 = vmul.f32 %v1340, %v1359
        %v1361 = vadd.f32 %v1360, 1.0
        %v1362 = vrcp.pop %v1361
        %v1363 = vmul.f32 %v1361, %v1362
        %v1364 = vsub.f32 1.0, %v1363
        %v1365 = vmul.f32 %v1362, %v1364
        %v1366 = vadd.f32 %v1362, %v1365
        %vm1367 = vweird.f32 %v1361
        %vm1368 = vweird.f32 %v1362
        %vm1369 = vmor %vm1367, %vm1368
        %v1370 = vsel %vm1369, %v1362, %v1366
        %v1371 = vand.u32 2147483647, %v1361
        %vm1372 = vcmp.eq.f32.partialorder %v1371, 8.507059e+37
        %v1373 = vand.u32 %v1361, 2147483648
        %v1374 = vor.u32 1.1754944e-38, %v1373
        %v1375 = vsel %vm1372, %v1374, %v1370
        %v1376 = vmul.f32 %v1351, %v1375
        %v1377 = vmin.f32 %v1376, 1.0
        %v1378 = vmax.f32 %v1377, -1.0
        %v1379 = vmul.f32 %v1293, %v1293
        %v1380 = vmin.f32 16.0, %v1379
        %v1381 = vmul.f32 %v1380, 2.1237322e-06
        %v1382 = vadd.f32 %v1381, 0.00028619796
        %v1383 = vmul.f32 %v1380, %v1382
        %v1384 = vadd.f32 %v1383, 0.0036580483
        %v1385 = vmul.f32 %v1380, %v1384
        %v1386 = vadd.f32 %v1385, 0.05243302
        %v1387 = vmul.f32 %v1380, %v1386
        %v1388 = vadd.f32 %v1387, 0.18741608
        %v1389 = vmul.f32 %v1380, %v1388
        %v1390 = vadd.f32 %v1389, 1.1283791
        %v1391 = vmul.f32 %v1293, %v1390
        %v1392 = vmul.f32 %v1380, 3.8918573e-05
        %v1393 = vadd.f32 %v1392, 0.001143296
        %v1394 = vmul.f32 %v1380, %v1393
        %v1395 = vadd.f32 %v1394, 0.014752088
        %v1396 = vmul.f32 %v1380, %v1395
        %v1397 = vadd.f32 %v1396, 0.112945676
        %v1398 = vmul.f32 %v1380, %v1397
        %v1399 = vadd.f32 %v1398, 0.4994258
        %v1400 = vmul.f32 %v1380, %v1399
        %v1401 = vadd.f32 %v1400, 1.0
        %v1402 = vrcp.pop %v1401
        %v1403 = vmul.f32 %v1401, %v1402
        %v1404 = vsub.f32 1.0, %v1403
        %v1405 = vmul.f32 %v1402, %v1404
        %v1406 = vadd.f32 %v1402, %v1405
        %vm1407 = vweird.f32 %v1401
        %vm1408 = vweird.f32 %v1402
        %vm1409 = vmor %vm1407, %vm1408
        %v1410 = vsel %vm1409, %v1402, %v1406
        %v1411 = vand.u32 2147483647, %v1401
        %vm1412 = vcmp.eq.f32.partialorder %v1411, 8.507059e+37
        %v1413 = vand.u32 %v1401, 2147483648
        %v1414 = vor.u32 1.1754944e-38, %v1413
        %v1415 = vsel %vm1412, %v1414, %v1410
        %v1416 = vmul.f32 %v1391, %v1415
        %v1417 = vmin.f32 %v1416, 1.0
        %v1418 = vmax.f32 %v1417, -1.0
        %v1419 = vmul.f32 %v1294, %v1294
        %v1420 = vmin.f32 16.0, %v1419
        %v1421 = vmul.f32 %v1420, 2.1237322e-06
        %v1422 = vadd.f32 %v1421, 0.00028619796
        %v1423 = vmul.f32 %v1420, %v1422
        %v1424 = vadd.f32 %v1423, 0.0036580483
        %v1425 = vmul.f32 %v1420, %v1424
        %v1426 = vadd.f32 %v1425, 0.05243302
        %v1427 = vmul.f32 %v1420, %v1426
        %v1428 = vadd.f32 %v1427, 0.18741608
        %v1429 = vmul.f32 %v1420, %v1428
        %v1430 = vadd.f32 %v1429, 1.1283791
        %v1431 = vmul.f32 %v1294, %v1430
        %v1432 = vmul.f32 %v1420, 3.8918573e-05
        %v1433 = vadd.f32 %v1432, 0.001143296
        %v1434 = vmul.f32 %v1420, %v1433
        %v1435 = vadd.f32 %v1434, 0.014752088
        %v1436 = vmul.f32 %v1420, %v1435
        %v1437 = vadd.f32 %v1436, 0.112945676
        %v1438 = vmul.f32 %v1420, %v1437
        %v1439 = vadd.f32 %v1438, 0.4994258
        %v1440 = vmul.f32 %v1420, %v1439
        %v1441 = vadd.f32 %v1440, 1.0
        %v1442 = vrcp.pop %v1441
        %v1443 = vmul.f32 %v1441, %v1442
        %v1444 = vsub.f32 1.0, %v1443
        %v1445 = vmul.f32 %v1442, %v1444
        %v1446 = vadd.f32 %v1442, %v1445
        %vm1447 = vweird.f32 %v1441
        %vm1448 = vweird.f32 %v1442
        %vm1449 = vmor %vm1447, %vm1448
        %v1450 = vsel %vm1449, %v1442, %v1446
        %v1451 = vand.u32 2147483647, %v1441
        %vm1452 = vcmp.eq.f32.partialorder %v1451, 8.507059e+37
        %v1453 = vand.u32 %v1441, 2147483648
        %v1454 = vor.u32 1.1754944e-38, %v1453
        %v1455 = vsel %vm1452, %v1454, %v1450
        %v1456 = vmul.f32 %v1431, %v1455
        %v1457 = vmin.f32 %v1456, 1.0
        %v1458 = vmax.f32 %v1457, -1.0
        %v1459 = vmul.f32 %v1295, %v1295
        %v1460 = vmin.f32 16.0, %v1459
        %v1461 = vmul.f32 %v1460, 2.1237322e-06
        %v1462 = vadd.f32 %v1461, 0.00028619796
        %v1463 = vmul.f32 %v1460, %v1462
        %v1464 = vadd.f32 %v1463, 0.0036580483
        %v1465 = vmul.f32 %v1460, %v1464
        %v1466 = vadd.f32 %v1465, 0.05243302
        %v1467 = vmul.f32 %v1460, %v1466
        %v1468 = vadd.f32 %v1467, 0.18741608
        %v1469 = vmul.f32 %v1460, %v1468
        %v1470 = vadd.f32 %v1469, 1.1283791
        %v1471 = vmul.f32 %v1295, %v1470
        %v1472 = vmul.f32 %v1460, 3.8918573e-05
        %v1473 = vadd.f32 %v1472, 0.001143296
        %v1474 = vmul.f32 %v1460, %v1473
        %v1475 = vadd.f32 %v1474, 0.014752088
        %v1476 = vmul.f32 %v1460, %v1475
        %v1477 = vadd.f32 %v1476, 0.112945676
        %v1478 = vmul.f32 %v1460, %v1477
        %v1479 = vadd.f32 %v1478, 0.4994258
        %v1480 = vmul.f32 %v1460, %v1479
        %v1481 = vadd.f32 %v1480, 1.0
        %v1482 = vrcp.pop %v1481
        %v1483 = vmul.f32 %v1481, %v1482
        %v1484 = vsub.f32 1.0, %v1483
        %v1485 = vmul.f32 %v1482, %v1484
        %v1486 = vadd.f32 %v1482, %v1485
        %vm1487 = vweird.f32 %v1481
        %vm1488 = vweird.f32 %v1482
        %vm1489 = vmor %vm1487, %vm1488
        %v1490 = vsel %vm1489, %v1482, %v1486
        %v1491 = vand.u32 2147483647, %v1481
        %vm1492 = vcmp.eq.f32.partialorder %v1491, 8.507059e+37
        %v1493 = vand.u32 %v1481, 2147483648
        %v1494 = vor.u32 1.1754944e-38, %v1493
        %v1495 = vsel %vm1492, %v1494, %v1490
        %v1496 = vmul.f32 %v1471, %v1495
        %v1497 = vmin.f32 %v1496, 1.0
        %v1498 = vmax.f32 %v1497, -1.0
        %v1499 = vmul.f32 %v1296, %v1296
        %v1500 = vmin.f32 16.0, %v1499
        %v1501 = vmul.f32 %v1500, 2.1237322e-06
        %v1502 = vadd.f32 %v1501, 0.00028619796
        %v1503 = vmul.f32 %v1500, %v1502
        %v1504 = vadd.f32 %v1503, 0.0036580483
        %v1505 = vmul.f32 %v1500, %v1504
        %v1506 = vadd.f32 %v1505, 0.05243302
        %v1507 = vmul.f32 %v1500, %v1506
        %v1508 = vadd.f32 %v1507, 0.18741608
        %v1509 = vmul.f32 %v1500, %v1508
        %v1510 = vadd.f32 %v1509, 1.1283791
        %v1511 = vmul.f32 %v1296, %v1510
        %v1512 = vmul.f32 %v1500, 3.8918573e-05
        %v1513 = vadd.f32 %v1512, 0.001143296
        %v1514 = vmul.f32 %v1500, %v1513
        %v1515 = vadd.f32 %v1514, 0.014752088
        %v1516 = vmul.f32 %v1500, %v1515
        %v1517 = vadd.f32 %v1516, 0.112945676
        %v1518 = vmul.f32 %v1500, %v1517
        %v1519 = vadd.f32 %v1518, 0.4994258
        %v1520 = vmul.f32 %v1500, %v1519
        %v1521 = vadd.f32 %v1520, 1.0
        %v1522 = vrcp.pop %v1521
        %v1523 = vmul.f32 %v1521, %v1522
        %v1524 = vsub.f32 1.0, %v1523
        %v1525 = vmul.f32 %v1522, %v1524
        %v1526 = vadd.f32 %v1522, %v1525
        %vm1527 = vweird.f32 %v1521
        %vm1528 = vweird.f32 %v1522
        %vm1529 = vmor %vm1527, %vm1528
        %v1530 = vsel %vm1529, %v1522, %v1526
        %v1531 = vand.u32 2147483647, %v1521
        %vm1532 = vcmp.eq.f32.partialorder %v1531, 8.507059e+37
        %v1533 = vand.u32 %v1521, 2147483648
        %v1534 = vor.u32 1.1754944e-38, %v1533
        %v1535 = vsel %vm1532, %v1534, %v1530
        %v1536 = vmul.f32 %v1511, %v1535
        %v1537 = vmin.f32 %v1536, 1.0
        %v1538 = vmax.f32 %v1537, -1.0
        %v1539 = vmul.f32 %v1297, %v1297
        %v1540 = vmin.f32 16.0, %v1539
        %v1541 = vmul.f32 %v1540, 2.1237322e-06
        %v1542 = vadd.f32 %v1541, 0.00028619796
        %v1543 = vmul.f32 %v1540, %v1542
        %v1544 = vadd.f32 %v1543, 0.0036580483
        %v1545 = vmul.f32 %v1540, %v1544
        %v1546 = vadd.f32 %v1545, 0.05243302
        %v1547 = vmul.f32 %v1540, %v1546
        %v1548 = vadd.f32 %v1547, 0.18741608
        %v1549 = vmul.f32 %v1540, %v1548
        %v1550 = vadd.f32 %v1549, 1.1283791
        %v1551 = vmul.f32 %v1297, %v1550
        %v1552 = vmul.f32 %v1540, 3.8918573e-05
        %v1553 = vadd.f32 %v1552, 0.001143296
        %v1554 = vmul.f32 %v1540, %v1553
        %v1555 = vadd.f32 %v1554, 0.014752088
        %v1556 = vmul.f32 %v1540, %v1555
        %v1557 = vadd.f32 %v1556, 0.112945676
        %v1558 = vmul.f32 %v1540, %v1557
        %v1559 = vadd.f32 %v1558, 0.4994258
        %v1560 = vmul.f32 %v1540, %v1559
        %v1561 = vadd.f32 %v1560, 1.0
        %v1562 = vrcp.pop %v1561
        %v1563 = vmul.f32 %v1561, %v1562
        %v1564 = vsub.f32 1.0, %v1563
        %v1565 = vmul.f32 %v1562, %v1564
        %v1566 = vadd.f32 %v1562, %v1565
        %vm1567 = vweird.f32 %v1561
        %vm1568 = vweird.f32 %v1562
        %vm1569 = vmor %vm1567, %vm1568
        %v1570 = vsel %vm1569, %v1562, %v1566
        %v1571 = vand.u32 2147483647, %v1561
        %vm1572 = vcmp.eq.f32.partialorder %v1571, 8.507059e+37
        %v1573 = vand.u32 %v1561, 2147483648
        %v1574 = vor.u32 1.1754944e-38, %v1573
        %v1575 = vsel %vm1572, %v1574, %v1570
        %v1576 = vmul.f32 %v1551, %v1575
        %v1577 = vmin.f32 %v1576, 1.0
        %v1578 = vmax.f32 %v1577, -1.0
        %v1579 = vmul.f32 %v1298, %v1298
        %v1580 = vmin.f32 16.0, %v1579
        %v1581 = vmul.f32 %v1580, 2.1237322e-06
        %v1582 = vadd.f32 %v1581, 0.00028619796
        %v1583 = vmul.f32 %v1580, %v1582
        %v1584 = vadd.f32 %v1583, 0.0036580483
        %v1585 = vmul.f32 %v1580, %v1584
        %v1586 = vadd.f32 %v1585, 0.05243302
        %v1587 = vmul.f32 %v1580, %v1586
        %v1588 = vadd.f32 %v1587, 0.18741608
        %v1589 = vmul.f32 %v1580, %v1588
        %v1590 = vadd.f32 %v1589, 1.1283791
        %v1591 = vmul.f32 %v1298, %v1590
        %v1592 = vmul.f32 %v1580, 3.8918573e-05
        %v1593 = vadd.f32 %v1592, 0.001143296
        %v1594 = vmul.f32 %v1580, %v1593
        %v1595 = vadd.f32 %v1594, 0.014752088
        %v1596 = vmul.f32 %v1580, %v1595
        %v1597 = vadd.f32 %v1596, 0.112945676
        %v1598 = vmul.f32 %v1580, %v1597
        %v1599 = vadd.f32 %v1598, 0.4994258
        %v1600 = vmul.f32 %v1580, %v1599
        %v1601 = vadd.f32 %v1600, 1.0
        %v1602 = vrcp.pop %v1601
        %v1603 = vmul.f32 %v1601, %v1602
        %v1604 = vsub.f32 1.0, %v1603
        %v1605 = vmul.f32 %v1602, %v1604
        %v1606 = vadd.f32 %v1602, %v1605
        %vm1607 = vweird.f32 %v1601
        %vm1608 = vweird.f32 %v1602
        %vm1609 = vmor %vm1607, %vm1608
        %v1610 = vsel %vm1609, %v1602, %v1606
        %v1611 = vand.u32 2147483647, %v1601
        %vm1612 = vcmp.eq.f32.partialorder %v1611, 8.507059e+37
        %v1613 = vand.u32 %v1601, 2147483648
        %v1614 = vor.u32 1.1754944e-38, %v1613
        %v1615 = vsel %vm1612, %v1614, %v1610
        %v1616 = vmul.f32 %v1591, %v1615
        %v1617 = vmin.f32 %v1616, 1.0
        %v1618 = vmax.f32 %v1617, -1.0
        %v1619 = vadd.f32 %v1338, 1.0
        %v1620 = vadd.f32 %v1378, 1.0
        %v1621 = vadd.f32 %v1418, 1.0
        %v1622 = vadd.f32 %v1458, 1.0
        %v1623 = vadd.f32 %v1498, 1.0
        %v1624 = vadd.f32 %v1538, 1.0
        %v1625 = vadd.f32 %v1578, 1.0
        %v1626 = vadd.f32 %v1618, 1.0
        %v1627 = vmul.f32 %v1283, %v1619
        %v1628 = vmul.f32 %v1284, %v1620
        %v1629 = vmul.f32 %v1285, %v1621
        %v1630 = vmul.f32 %v1286, %v1622
        %v1631 = vmul.f32 %v1287, %v1623
        %v1632 = vmul.f32 %v1288, %v1624
        %v1633 = vmul.f32 %v1289, %v1625
        %v1634 = vmul.f32 %v1290, %v1626
        %v1635 = vadd.f32 %v1041, %v1627
        %v1636 = vadd.f32 %v1042, %v1628
        %v1637 = vadd.f32 %v1043, %v1629
        %v1638 = vadd.f32 %v1044, %v1630
        %v1639 = vadd.f32 %v1045, %v1631
        %v1640 = vadd.f32 %v1046, %v1632
        %v1641 = vadd.f32 %v1047, %v1633
        %v1642 = vadd.f32 %v1048, %v1634
        %v1643 = vpack.c.bf16 %v1636, %v1635
        %v1644 = vpack.c.bf16 %v1638, %v1637
        %v1645 = vpack.c.bf16 %v1640, %v1639
        %v1646 = vpack.c.bf16 %v1642, %v1641
        %v1647 = vld [vmem:[#allocation8] sm:$0xf]
        %v1648 = vld [vmem:[#allocation8 + $0x4] sm:$0xf]
        %v1649 = vld [vmem:[#allocation8 + $0x8] sm:$0xf]
        %v1650 = vld [vmem:[#allocation8 + $0xc] sm:$0xf]
        %v1651 = vld [vmem:[#allocation8 + $0x10] sm:$0xf]
        %v1652 = vld [vmem:[#allocation8 + $0x14] sm:$0xf]
        %v1653 = vld [vmem:[#allocation8 + $0x18] sm:$0xf]
        %v1654 = vld [vmem:[#allocation8 + $0x1c] sm:$0xf]
        %v1655 = vld [vmem:[#allocation8 + $0x20] sm:$0xf]
        %v1656 = vld [vmem:[#allocation8 + $0x24] sm:$0xf]
        %v1657 = vld [vmem:[#allocation8 + $0x28] sm:$0xf]
        %v1658 = vld [vmem:[#allocation8 + $0x2c] sm:$0xf]
        %v1659 = vld [vmem:[#allocation8 + $0x30] sm:$0xf]
        %v1660 = vld [vmem:[#allocation8 + $0x34] sm:$0xf]
        %v1661 = vld [vmem:[#allocation8 + $0x38] sm:$0xf]
        %v1662 = vld [vmem:[#allocation8 + $0x3c] sm:$0xf]
        %v1663 = vld [vmem:[%s7] sm:$0x1]
        %v1665 = vperm.slane %v1663, 0
        %v1683 = vunpack.c.l.b16 %v1647
        %v1684 = vunpack.c.l.b16 %v1648
        %v1685 = vunpack.c.l.b16 %v1649
        %v1686 = vunpack.c.l.b16 %v1650
        %v1687 = vunpack.c.l.b16 %v1651
        %v1688 = vunpack.c.l.b16 %v1652
        %v1689 = vunpack.c.l.b16 %v1653
        %v1690 = vunpack.c.l.b16 %v1654
        %v1691 = vunpack.c.l.b16 %v1655
        %v1692 = vunpack.c.l.b16 %v1656
        %v1693 = vunpack.c.l.b16 %v1657
        %v1694 = vunpack.c.l.b16 %v1658
        %v1695 = vunpack.c.l.b16 %v1659
        %v1696 = vunpack.c.l.b16 %v1660
        %v1697 = vunpack.c.l.b16 %v1661
        %v1698 = vunpack.c.l.b16 %v1662
        %v1699 = vpack.c.b16 %v1684, %v1683
        %v1700 = vpack.c.b16 %v1686, %v1685
        %v1701 = vpack.c.b16 %v1688, %v1687
        %v1702 = vpack.c.b16 %v1690, %v1689
        %v1703 = vpack.c.b16 %v1692, %v1691
        %v1704 = vpack.c.b16 %v1694, %v1693
        %v1705 = vpack.c.b16 %v1696, %v1695
        %v1706 = vpack.c.b16 %v1698, %v1697
        %1715 = vmatpush.bf16.msra.mxu0 %v1706
        %1716 = vmatpush.bf16.msra.mxu0 %v1705
        %1717 = vmatpush.bf16.msra.mxu0 %v1704
        %1718 = vmatpush.bf16.msra.mxu0 %v1703
        %1719 = vmatpush.bf16.msra.mxu0 %v1702
        %1720 = vmatpush.bf16.msra.mxu0 %v1701
        %1721 = vmatpush.bf16.msra.mxu0 %v1700
        %1722 = vmatpush.bf16.msra.mxu0 %v1699
        %1723 = vmatmul.bf16.gmra.mxu0 %v1643
        %v1724 = vpop.f32.mrf.mxu0
        %v1725 = vadd.f32 %v1665, %v1724
        %v1726 = vpop.f32.mrf.mxu0
        %v1727 = vadd.f32 %v1665, %v1726
        %1728 = vmatmul.bf16.gmra.mxu0 %v1644
        %v1729 = vpop.f32.mrf.mxu0
        %v1730 = vadd.f32 %v1665, %v1729
        %v1731 = vpop.f32.mrf.mxu0
        %v1732 = vadd.f32 %v1665, %v1731
        %1733 = vmatmul.bf16.gmra.mxu0 %v1645
        %v1734 = vpop.f32.mrf.mxu0
        %v1735 = vadd.f32 %v1665, %v1734
        %v1736 = vpop.f32.mrf.mxu0
        %v1737 = vadd.f32 %v1665, %v1736
        %1738 = vmatmul.bf16.gmra.mxu0 %v1646
        %v1739 = vpop.f32.mrf.mxu0
        %v1740 = vadd.f32 %v1665, %v1739
        %v1741 = vpop.f32.mrf.mxu0
        %v1742 = vadd.f32 %v1665, %v1741
        %1743 = vdwg.mxu0
        %v1744 = vadd.f32 %v1725, %v1727
        %v1745 = vadd.f32 %v1744, %v1730
        %v1746 = vadd.f32 %v1745, %v1732
        %v1747 = vadd.f32 %v1746, %v1735
        %v1748 = vadd.f32 %v1747, %v1737
        %v1749 = vadd.f32 %v1748, %v1740
        %v1750 = vadd.f32 %v1749, %v1742
        %v1751 = vrot.slane %v1750, 4
        %v1752 = vadd.f32 %v1750, %v1751
        %v1753 = vrot.slane %v1752, 2
        %v1754 = vadd.f32 %v1752, %v1753
        %v1755 = vrot.slane %v1754, 1
        %v1756 = vadd.f32 %v1754, %v1755
        %v1757 = vrcp.pop 64.0
        %v1758 = vmul.f32 64.0, %v1757
        %v1759 = vsub.f32 1.0, %v1758
        %v1760 = vmul.f32 %v1757, %v1759
        %v1761 = vadd.f32 %v1757, %v1760
        %vm1762 = vweird.f32 %v1757
        %v1763 = vsel %vm1762, %v1757, %v1761
        %v1764 = vmul.f32 %v1756, %v1763
        %v1765 = vpack.c.bf16 %v1764, %v1764
        %v1766 = vld [vmem:[#allocation10] sm:$0xf]
        %v1767 = vld [vmem:[#allocation10 + $0x4] sm:$0xf]
        %v1768 = vld [vmem:[#allocation10 + $0x8] sm:$0xf]
        %v1769 = vld [vmem:[#allocation10 + $0xc] sm:$0xf]
        %v1770 = vld [vmem:[#allocation10 + $0x10] sm:$0xf]
        %v1771 = vld [vmem:[#allocation10 + $0x14] sm:$0xf]
        %v1772 = vld [vmem:[#allocation10 + $0x18] sm:$0xf]
        %v1773 = vld [vmem:[#allocation10 + $0x1c] sm:$0xf]
        %v1774 = vld [vmem:[#allocation10 + $0x20] sm:$0xf]
        %v1775 = vld [vmem:[#allocation10 + $0x24] sm:$0xf]
        %v1776 = vld [vmem:[#allocation10 + $0x28] sm:$0xf]
        %v1777 = vld [vmem:[#allocation10 + $0x2c] sm:$0xf]
        %v1778 = vld [vmem:[#allocation10 + $0x30] sm:$0xf]
        %v1779 = vld [vmem:[#allocation10 + $0x34] sm:$0xf]
        %v1780 = vld [vmem:[#allocation10 + $0x38] sm:$0xf]
        %v1781 = vld [vmem:[#allocation10 + $0x3c] sm:$0xf]
        %v1782 = vld [vmem:[%s9] sm:$0x1]
        %v1799 = vunpack.c.l.b16 %v1766
        %v1800 = vunpack.c.l.b16 %v1767
        %v1801 = vunpack.c.l.b16 %v1768
        %v1802 = vunpack.c.l.b16 %v1769
        %v1803 = vunpack.c.l.b16 %v1770
        %v1804 = vunpack.c.l.b16 %v1771
        %v1805 = vunpack.c.l.b16 %v1772
        %v1806 = vunpack.c.l.b16 %v1773
        %v1807 = vunpack.c.l.b16 %v1774
        %v1808 = vunpack.c.l.b16 %v1775
        %v1809 = vunpack.c.l.b16 %v1776
        %v1810 = vunpack.c.l.b16 %v1777
        %v1811 = vunpack.c.l.b16 %v1778
        %v1812 = vunpack.c.l.b16 %v1779
        %v1813 = vunpack.c.l.b16 %v1780
        %v1814 = vunpack.c.l.b16 %v1781
        %v1815 = vpack.c.b16 %v1800, %v1799
        %v1816 = vpack.c.b16 %v1802, %v1801
        %v1817 = vpack.c.b16 %v1804, %v1803
        %v1818 = vpack.c.b16 %v1806, %v1805
        %v1819 = vpack.c.b16 %v1808, %v1807
        %v1820 = vpack.c.b16 %v1810, %v1809
        %v1821 = vpack.c.b16 %v1812, %v1811
        %v1822 = vpack.c.b16 %v1814, %v1813
        %1831 = vmatpush.bf16.msra.mxu0 %v1822
        %1832 = vmatpush.bf16.msra.mxu0 %v1821
        %1833 = vmatpush.bf16.msra.mxu0 %v1820
        %1834 = vmatpush.bf16.msra.mxu0 %v1819
        %1835 = vmatpush.bf16.msra.mxu0 %v1818
        %1836 = vmatpush.bf16.msra.mxu0 %v1817
        %1837 = vmatpush.bf16.msra.mxu0 %v1816
        %1838 = vmatpush.bf16.msra.mxu0 %v1815
        %1839 = vmatmul.bf16.gmra.mxu0 %v1765
        %v1840 = vpop.f32.mrf.mxu0
        %v1841 = vadd.f32 %v1782, %v1840
        %v1842 = vpop.f32.mrf.mxu0
        %1843 = vdwg.mxu0
        %v1844 = vmul.f32 %v1841, 0.5
        %v1845 = vmul.f32 %v1841, 0.70710677
        %v1846 = vmul.f32 %v1845, %v1845
        %v1847 = vmin.f32 16.0, %v1846
        %v1848 = vmul.f32 %v1847, 2.1237322e-06
        %v1849 = vadd.f32 %v1848, 0.00028619796
        %v1850 = vmul.f32 %v1847, %v1849
        %v1851 = vadd.f32 %v1850, 0.0036580483
        %v1852 = vmul.f32 %v1847, %v1851
        %v1853 = vadd.f32 %v1852, 0.05243302
        %v1854 = vmul.f32 %v1847, %v1853
        %v1855 = vadd.f32 %v1854, 0.18741608
        %v1856 = vmul.f32 %v1847, %v1855
        %v1857 = vadd.f32 %v1856, 1.1283791
        %v1858 = vmul.f32 %v1845, %v1857
        %v1859 = vmul.f32 %v1847, 3.8918573e-05
        %v1860 = vadd.f32 %v1859, 0.001143296
        %v1861 = vmul.f32 %v1847, %v1860
        %v1862 = vadd.f32 %v1861, 0.014752088
        %v1863 = vmul.f32 %v1847, %v1862
        %v1864 = vadd.f32 %v1863, 0.112945676
        %v1865 = vmul.f32 %v1847, %v1864
        %v1866 = vadd.f32 %v1865, 0.4994258
        %v1867 = vmul.f32 %v1847, %v1866
        %v1868 = vadd.f32 %v1867, 1.0
        %v1869 = vrcp.pop %v1868
        %v1870 = vmul.f32 %v1868, %v1869
        %v1871 = vsub.f32 1.0, %v1870
        %v1872 = vmul.f32 %v1869, %v1871
        %v1873 = vadd.f32 %v1869, %v1872
        %vm1874 = vweird.f32 %v1868
        %vm1875 = vweird.f32 %v1869
        %vm1876 = vmor %vm1874, %vm1875
        %v1877 = vsel %vm1876, %v1869, %v1873
        %v1878 = vand.u32 2147483647, %v1868
        %vm1879 = vcmp.eq.f32.partialorder %v1878, 8.507059e+37
        %v1880 = vand.u32 %v1868, 2147483648
        %v1881 = vor.u32 1.1754944e-38, %v1880
        %v1882 = vsel %vm1879, %v1881, %v1877
        %v1883 = vmul.f32 %v1858, %v1882
        %v1884 = vmin.f32 %v1883, 1.0
        %v1885 = vmax.f32 %v1884, -1.0
        %v1886 = vadd.f32 %v1885, 1.0
        %v1887 = vmul.f32 %v1844, %v1886
        %v1888 = vpack.c.bf16 %v1887, %v1887
        %v1889 = vld [vmem:[#allocation11] sm:$0xf]
        %v1890 = vld [vmem:[#allocation11 + $0x4] sm:$0xf]
        %v1891 = vld [vmem:[#allocation11 + $0x8] sm:$0xf]
        %v1892 = vld [vmem:[#allocation11 + $0xc] sm:$0xf]
        %v1893 = vld [vmem:[#allocation11 + $0x10] sm:$0xf]
        %v1894 = vld [vmem:[#allocation11 + $0x14] sm:$0xf]
        %v1895 = vld [vmem:[#allocation11 + $0x18] sm:$0xf]
        %v1896 = vld [vmem:[#allocation11 + $0x1c] sm:$0xf]
        %v1897 = vld [vmem:[#allocation11 + $0x20] sm:$0xf]
        %v1898 = vld [vmem:[#allocation11 + $0x24] sm:$0xf]
        %v1899 = vld [vmem:[#allocation11 + $0x28] sm:$0xf]
        %v1900 = vld [vmem:[#allocation11 + $0x2c] sm:$0xf]
        %v1901 = vld [vmem:[#allocation11 + $0x30] sm:$0xf]
        %v1902 = vld [vmem:[#allocation11 + $0x34] sm:$0xf]
        %v1903 = vld [vmem:[#allocation11 + $0x38] sm:$0xf]
        %v1904 = vld [vmem:[#allocation11 + $0x3c] sm:$0xf]
        %v1905 = vld [vmem:[%s11] sm:$0x1]
        %v1922 = vunpack.c.l.b16 %v1889
        %v1923 = vunpack.c.l.b16 %v1890
        %v1924 = vunpack.c.l.b16 %v1891
        %v1925 = vunpack.c.l.b16 %v1892
        %v1926 = vunpack.c.l.b16 %v1893
        %v1927 = vunpack.c.l.b16 %v1894
        %v1928 = vunpack.c.l.b16 %v1895
        %v1929 = vunpack.c.l.b16 %v1896
        %v1930 = vunpack.c.l.b16 %v1897
        %v1931 = vunpack.c.l.b16 %v1898
        %v1932 = vunpack.c.l.b16 %v1899
        %v1933 = vunpack.c.l.b16 %v1900
        %v1934 = vunpack.c.l.b16 %v1901
        %v1935 = vunpack.c.l.b16 %v1902
        %v1936 = vunpack.c.l.b16 %v1903
        %v1937 = vunpack.c.l.b16 %v1904
        %v1938 = vpack.c.b16 %v1923, %v1922
        %v1939 = vpack.c.b16 %v1925, %v1924
        %v1940 = vpack.c.b16 %v1927, %v1926
        %v1941 = vpack.c.b16 %v1929, %v1928
        %v1942 = vpack.c.b16 %v1931, %v1930
        %v1943 = vpack.c.b16 %v1933, %v1932
        %v1944 = vpack.c.b16 %v1935, %v1934
        %v1945 = vpack.c.b16 %v1937, %v1936
        %1954 = vmatpush.bf16.msra.mxu0 %v1945
        %1955 = vmatpush.bf16.msra.mxu0 %v1944
        %1956 = vmatpush.bf16.msra.mxu0 %v1943
        %1957 = vmatpush.bf16.msra.mxu0 %v1942
        %1958 = vmatpush.bf16.msra.mxu0 %v1941
        %1959 = vmatpush.bf16.msra.mxu0 %v1940
        %1960 = vmatpush.bf16.msra.mxu0 %v1939
        %1961 = vmatpush.bf16.msra.mxu0 %v1938
        %1962 = vmatmul.bf16.gmra.mxu0 %v1888
        %v1963 = vpop.f32.mrf.mxu0
        %v1964 = vadd.f32 %v1905, %v1963
        %v1965 = vpop.f32.mrf.mxu0
        %1966 = vdwg.mxu0
        %v1967 = vld [vmem:[%s567] sm:$0x1]
        %v1968 = vunpack.c.l.bf16 %v1967
        %v1969 = vmul.f32 %v1968, %v1964
        %1970 = vst [vmem:[%s557] sm:$0x1] %v1969
        %1971 = vst [vmem:[%s564] sm:$0xff] %v1725
        %1972 = vst [vmem:[%s564 + $0x8] sm:$0xff] %v1727
        %1973 = vst [vmem:[%s564 + $0x10] sm:$0xff] %v1730
        %1974 = vst [vmem:[%s564 + $0x18] sm:$0xff] %v1732
        %1975 = vst [vmem:[%s564 + $0x20] sm:$0xff] %v1735
        %1976 = vst [vmem:[%s564 + $0x28] sm:$0xff] %v1737
        %1977 = vst [vmem:[%s564 + $0x30] sm:$0xff] %v1740
        %1978 = vst [vmem:[%s564 + $0x38] sm:$0xff] %v1742
        %s1979 = sand.u32 %s307, 1
        %s1980 = scalar_lea.sflag [#allocation4], %s1979
        %s1981 = sand.u32 %s307, 1
        %s1982 = scalar_lea.vmem [#allocation13], %s1981
        %s1983 = sand.u32 %s333, 1
        %s1984 = scalar_lea.sflag [#allocation15], %s1983
        %s1985 = sand.u32 %s333, 1
        %s1986 = smul.addr %s1985, 64
        %s1987 = scalar_lea.vmem [#allocation14], %s1986
        // Predicated region
        $region93: #{tpu_custom_call.1} parent=67 // pred_check
          %p1988 = pneg %p317
        $region94: #{tpu_custom_call.1} parent=67 // pred_check_branch
          %1990 = sbr.rel (%p1988) target = $region96
        $region95: #{tpu_custom_call.1} parent=67 // pred_region
          %1992 = vsyncadd %s1980, 0
          %s1993 = scalar_lea.hbm %s12, %s37
          %s1995 = sshll.u32 %s1982, 4
          %s1996 = int_to_ptr.vmem [resolvable:$true] %s1995
          %s1997 = sshll.u32 %s1993, 4
          %s1998 = int_to_ptr.hbm [resolvable:$true] %s1997
          %2000 = dma.vmem_to_hbm [thread:$0]  %s1996, 16, %s1998, %s1980
        $region96: #{tpu_custom_call.1} parent=67 // pred_fallthru
          _
        // Predicated region
        $region97: #{tpu_custom_call.1} parent=67 // pred_check
          %p2001 = pneg %p343
        $region98: #{tpu_custom_call.1} parent=67 // pred_check_branch
          %2003 = sbr.rel (%p2001) target = $region100
        $region99: #{tpu_custom_call.1} parent=67 // pred_region
          %2005 = vsyncadd %s1984, 0
          %s2006 = smul.addr %s37, 8
          %s2007 = smul.addr %s2006, 8
          %s2008 = scalar_lea.hbm %s13, %s2007
          %s2009 = sshll.u32 %s1987, 4
          %s2010 = int_to_ptr.vmem [resolvable:$true] %s2009
          %s2011 = sshll.u32 %s2008, 4
          %s2012 = int_to_ptr.hbm [resolvable:$true] %s2011
          %2017 = dma.vmem_to_hbm [thread:$0]  %s2010, 1024, %s2012, %s1984, 128, 128, 8
        $region100: #{tpu_custom_call.1} parent=67 // pred_fallthru
          _
      $region68: #{tpu_custom_call.1} parent=5 // pred_fallthru
        _
      %p2018 = scmp.le.s32.totalorder 2, %s32
      // Predicated region
      $region101: #{tpu_custom_call.1} parent=5 // pred_check
        %p2019 = pneg %p2018
      $region102: #{tpu_custom_call.1} parent=5 // pred_check_branch
        %2021 = sbr.rel (%p2019) target = $region104
      $region103: #{tpu_custom_call.1} parent=5 // pred_region
        %s2022 = ssub.s32 %s32, 2
        // Predicated region
        $region105: #{tpu_custom_call.1} parent=103 // pred_check
          %p2023 = pneg %p323
        $region106: #{tpu_custom_call.1} parent=103 // pred_check_branch
          %2025 = sbr.rel (%p2023) target = $region108
        $region107: #{tpu_custom_call.1} parent=103 // pred_region
          %s2026 = sand.u32 %s308, 1
          %s2027 = scalar_lea.sflag [#allocation4], %s2026
          %s2028 = sand.u32 %s308, 1
          %s2029 = scalar_lea.vmem [#allocation13], %s2028
          %2031 = dma.done %s2027, 16
        $region108: #{tpu_custom_call.1} parent=103 // pred_fallthru
          _
        // Predicated region
        $region109: #{tpu_custom_call.1} parent=103 // pred_check
          %p2032 = pneg %p349
        $region110: #{tpu_custom_call.1} parent=103 // pred_check_branch
          %2034 = sbr.rel (%p2032) target = $region112
        $region111: #{tpu_custom_call.1} parent=103 // pred_region
          %s2035 = sand.u32 %s334, 1
          %s2036 = scalar_lea.sflag [#allocation15], %s2035
          %s2037 = sand.u32 %s334, 1
          %s2038 = smul.addr %s2037, 64
          %s2039 = scalar_lea.vmem [#allocation14], %s2038
          %2041 = dma.done %s2036, 1024
        $region112: #{tpu_custom_call.1} parent=103 // pred_fallthru
          _
      $region104: #{tpu_custom_call.1} parent=5 // pred_fallthru
        _
    $region6: #{tpu_custom_call.1} parent=1 // loop_footer
      %s36 = sadd.s32 1, %s32
    $region7: #{tpu_custom_call.1} parent=1 // loop_footer_branch
      %31 = sbr.rel target = $region3
    $region8: #{tpu_custom_call.1} parent=1 // loop_exit
      _
    %2042 = vsyncpa [#allocation3], 1
    %s2043 = scalar_lea.sflag [#allocation3], 1
    %2044 = vsyncpa %s2043, 1
    %2045 = vsyncpa [#allocation6], 1
    %2046 = vsyncpa [#allocation9], 1
    %2047 = vsyncpa [#allocation12], 1
    %2048 = vsyncpa [#allocation4], 1
    %s2049 = scalar_lea.sflag [#allocation4], 1
    %2050 = vsyncpa %s2049, 1
    %2051 = vsyncpa [#allocation15], 1
    %s2052 = scalar_lea.sflag [#allocation15], 1
    %2053 = vsyncpa %s2052, 1

</llo_original>
